<compile_context>
chip_gen: v7x
topology: tpu7x:2x2x1
jax: 0.10.0
libtpu: 0.0.40
codegen_flags: <defaults>
</compile_context>

<pallas_src>
import functools

import jax
import jax.numpy as jnp
from jax import lax
from jax.experimental import pallas as pl
from jax.experimental.pallas import tpu as pltpu

KERNEL_SIZE = 7


def _spatial_attention_kernel(x_ref, w_ref, o_ref, sum_ref, max_ref, *,
                              C, H, W, K, c_tile):
    """Grid = (batch, channel_tiles).

    x_ref:   (c_tile, H*W)  VMEM block (lane-dense)
    w_ref:   (2*K*K,)       SMEM scalar weights; [0:K*K] = avg, [K*K:] = max
    o_ref:   (1, H*W)       VMEM output block (written on last channel step)
    sum_ref: (1, H*W) f32   VMEM scratch, running channel sum
    max_ref: (1, H*W) f32   VMEM scratch, running channel max
    """
    pad = K // 2
    HW = H * W
    KK = K * K
    c_idx = pl.program_id(1)
    n_c = pl.num_programs(1)

    @pl.when(c_idx == 0)
    def _init():
        sum_ref[...] = jnp.zeros((1, HW), jnp.float32)
        max_ref[...] = jnp.full((1, HW), -jnp.inf, jnp.float32)

    # Streaming channel reduction over this channel tile.
    x = x_ref[...].astype(jnp.float32)                       # (c_tile, HW)
    if C % c_tile != 0:
        # Remainder tile: rows past C hold undefined block padding -> mask.
        row = c_idx * c_tile + lax.broadcasted_iota(jnp.int32, (c_tile, HW), 0)
        valid = row < C
        x_sum = jnp.where(valid, x, 0.0)
        x_max = jnp.where(valid, x, -jnp.inf)
    else:
        x_sum = x
        x_max = x
    sum_ref[...] += jnp.sum(x_sum, axis=0, keepdims=True)
    max_ref[...] = jnp.maximum(max_ref[...],
                               jnp.max(x_max, axis=0, keepdims=True))

    # Epilogue: 7x7 conv (cross-correlation) over [avg, max] + sigmoid.
    @pl.when(c_idx == n_c - 1)
    def _epilogue():
        avg_f = sum_ref[...] * jnp.float32(1.0 / C)          # (1, HW)
        max_f = max_ref[...]                                 # (1, HW)

        # Flat position -> column index (row masks need only flat-range tests).
        pos = lax.broadcasted_iota(jnp.int32, (1, HW), 1)
        if (W & (W - 1)) == 0:
            col = jnp.bitwise_and(pos, W - 1)                # cheap: W power of 2
        else:
            # TODO(synk): non-power-of-two W relies on vector int remainder.
            col = pos % W

        # Hoisted boundary masks: 7 row masks + 7 col masks instead of 49 each.
        row_ok = []
        for u in range(K):
            du = u - pad
            lo = max(0, -du) * W                 # 0 <= row + du < H  <=>  lo <= p < hi
            hi = (H - max(0, du)) * W
            row_ok.append(jnp.logical_and(pos >= lo, pos < hi))
        col_ok = []
        for v in range(K):
            dv = v - pad
            col_ok.append(jnp.logical_and(col >= max(0, -dv),
                                          col < W - max(0, dv)))

        accs = [jnp.zeros((1, HW), jnp.float32) for _ in range(4)]
        for u in range(K):
            du = u - pad
            for v in range(K):
                dv = v - pad
                # out[p] += w * f[p + s], s = du*W + dv; wrapped lanes masked off.
                s = du * W + dv
                if s == 0:
                    sh_avg, sh_max = avg_f, max_f
                else:
                    shift = (-s) % HW                        # jnp.roll semantics
                    sh_avg = pltpu.roll(avg_f, shift, 1)
                    sh_max = pltpu.roll(max_f, shift, 1)

                tap = u * K + v
                contrib = w_ref[tap] * sh_avg + w_ref[KK + tap] * sh_max
                contrib = jnp.where(jnp.logical_and(row_ok[u], col_ok[v]),
                                    contrib, 0.0)
                accs[tap % 4] = accs[tap % 4] + contrib

        conv = (accs[0] + accs[1]) + (accs[2] + accs[3])
        o_ref[...] = jax.nn.sigmoid(conv).astype(o_ref.dtype)


def _pick_c_tile(C, HW, itemsize, budget_bytes=2 << 20):
    """Channel-tile from a VMEM byte budget.  Must be a multiple of 8 or equal
    to C (block layout rule); need not divide C (remainder tile is masked)."""
    if C <= 8:
        return C
    t = int((budget_bytes // max(1, HW * itemsize)) // 8 * 8)
    t = max(8, t)
    return C if t >= C else t


def spatial_attention(x, conv_weight):
    """x: (N, C, H, W); conv_weight: (1, 2, K, K) PyTorch OIHW layout, no bias."""
    N, C, H, W = x.shape
    K = conv_weight.shape[-1]
    HW = H * W

    # Lane-dense presentation at the pallas_call boundary (free XLA reshapes).
    x_flat = x.reshape(N, C, HW)
    w_flat = conv_weight.astype(jnp.float32).reshape(2 * K * K)

    c_tile = _pick_c_tile(C, HW, jnp.dtype(x.dtype).itemsize)
    n_c = pl.cdiv(C, c_tile)

    kernel = functools.partial(_spatial_attention_kernel,
                               C=C, H=H, W=W, K=K, c_tile=c_tile)

    out_flat = pl.pallas_call(
        kernel,
        out_shape=jax.ShapeDtypeStruct((N, 1, HW), x.dtype),
        grid_spec=pltpu.PrefetchScalarGridSpec(
            num_scalar_prefetch=0,
            grid=(N, n_c),
            in_specs=[
                pl.BlockSpec((None, c_tile, HW), lambda b, c: (b, c, 0)),
                pl.BlockSpec(memory_space=pltpu.MemorySpace.SMEM),
            ],
            out_specs=pl.BlockSpec((None, 1, HW), lambda b, c: (b, 0, 0)),
            scratch_shapes=[
                pltpu.VMEM((1, HW), jnp.float32),   # running sum
                pltpu.VMEM((1, HW), jnp.float32),   # running max
            ],
        ),
        compiler_params=pltpu.CompilerParams(
            dimension_semantics=("parallel", "arbitrary")),
    )(x_flat, w_flat)

    return out_flat.reshape(N, 1, H, W)


def spatial_attention_ref(x, conv_weight):
    """Plain-JAX reference for verification."""
    avg_out = jnp.mean(x, axis=1, keepdims=True)
    max_out = jnp.max(x, axis=1, keepdims=True)
    feat = jnp.concatenate([avg_out, max_out], axis=1)       # (N, 2, H, W)
    pad = conv_weight.shape[-1] // 2
    y = lax.conv_general_dilated(
        feat, conv_weight,
        window_strides=(1, 1),
        padding=((pad, pad), (pad, pad)),
        dimension_numbers=("NCHW", "OIHW", "NCHW"),
    )
    return jax.nn.sigmoid(y)


if __name__ == "__main__":
    key = jax.random.PRNGKey(0)
    kx, kw = jax.random.split(key)

    N, C, H, W = 2, 4, 16, 16
    x = jax.random.normal(kx, (N, C, H, W), dtype=jnp.float32)

    # Conv weight, shape (out=1, in=2, 7, 7), no bias (matches nn.Conv2d init range).
    fan_in = 2 * KERNEL_SIZE * KERNEL_SIZE
    bound = 1.0 / (fan_in ** 0.5)
    conv_weight = jax.random.uniform(
        kw, (1, 2, KERNEL_SIZE, KERNEL_SIZE), dtype=jnp.float32,
        minval=-bound, maxval=bound)

    out = spatial_attention(x, conv_weight)
    out = jax.block_until_ready(out)

    ref = spatial_attention_ref(x, conv_weight)
    assert out.shape == (N, 1, H, W)
    assert jnp.allclose(out, ref, atol=1e-5, rtol=1e-5), "mismatch vs reference"

    print("KERNEL_OK")
</pallas_src>

<mosaic_0001>
module attributes {stable_mosaic.version = 11 : i64} {
  func.func @_spatial_attention_kernel(%arg0: i32, %arg1: i32, %arg2: memref<1x4x256xf32, #tpu.memory_space<vmem>>, %arg3: memref<98xf32, #tpu.memory_space<smem>>, %arg4: memref<1x1x256xf32, #tpu.memory_space<vmem>>, %arg5: memref<1x256xf32, #tpu.memory_space<vmem>>, %arg6: memref<1x256xf32, #tpu.memory_space<vmem>>) attributes {dimension_semantics = [#tpu.dimension_semantics<parallel>, #tpu.dimension_semantics<arbitrary>], iteration_bounds = array<i64: 2, 1>, scalar_prefetch = 0 : i64, scratch_operands = 2 : i64, tpu.core_type = #tpu.core_type<tc>, window_params = [{transform_indices = @transform_0, window_bounds = array<i64: 1, 4, 256>}, {transform_indices = @transform_1, window_bounds = array<i64: 98>}, {transform_indices = @transform_2, window_bounds = array<i64: 1, 1, 256>}]} {
    %c0_i32 = arith.constant 0 : i32
    %0 = arith.cmpi eq, %arg1, %c0_i32 : i32
    %1 = arith.extui %0 : i1 to i32
    %c0_i32_0 = arith.constant 0 : i32
    %2 = arith.cmpi ne, %1, %c0_i32_0 : i32
    scf.if %2 {
      %cst_14 = arith.constant 0.000000e+00 : f32
      %18 = vector.broadcast %cst_14 : f32 to vector<1x256xf32>
      %c0_15 = arith.constant 0 : index
      %c0_16 = arith.constant 0 : index
      %19 = vector.load %arg5[%c0_15, %c0_16] : memref<1x256xf32, #tpu.memory_space<vmem>>, vector<1x256xf32>
      tpu.vector_store %arg5[%c0_15, %c0_16], %18 {strides = array<i32>} : memref<1x256xf32, #tpu.memory_space<vmem>>, vector<1x256xf32>,
      %cst_17 = arith.constant 0xFF800000 : f32
      %20 = vector.broadcast %cst_17 : f32 to vector<1x256xf32>
      %c0_18 = arith.constant 0 : index
      %c0_19 = arith.constant 0 : index
      %21 = vector.load %arg6[%c0_18, %c0_19] : memref<1x256xf32, #tpu.memory_space<vmem>>, vector<1x256xf32>
      tpu.vector_store %arg6[%c0_18, %c0_19], %20 {strides = array<i32>} : memref<1x256xf32, #tpu.memory_space<vmem>>, vector<1x256xf32>,
    } else {
    }
    %c0 = arith.constant 0 : index
    %c0_1 = arith.constant 0 : index
    %c0_2 = arith.constant 0 : index
    %3 = vector.load %arg2[%c0, %c0_1, %c0_2] : memref<1x4x256xf32, #tpu.memory_space<vmem>>, vector<1x4x256xf32>
    %4 = vector.shape_cast %3 : vector<1x4x256xf32> to vector<4x256xf32>
    %c0_3 = arith.constant 0 : index
    %c0_4 = arith.constant 0 : index
    %5 = vector.load %arg5[%c0_3, %c0_4] : memref<1x256xf32, #tpu.memory_space<vmem>>, vector<1x256xf32>
    %cst = arith.constant dense<0.000000e+00> : vector<256xf32>
    %6 = vector.multi_reduction <add>, %4, %cst [0] : vector<4x256xf32> to vector<256xf32>
    %7 = vector.shape_cast %6 : vector<256xf32> to vector<1x256xf32>
    %8 = arith.addf %5, %7 : vector<1x256xf32>
    %c0_5 = arith.constant 0 : index
    %c0_6 = arith.constant 0 : index
    %9 = vector.load %arg5[%c0_5, %c0_6] : memref<1x256xf32, #tpu.memory_space<vmem>>, vector<1x256xf32>
    tpu.vector_store %arg5[%c0_5, %c0_6], %8 {strides = array<i32>} : memref<1x256xf32, #tpu.memory_space<vmem>>, vector<1x256xf32>,
    %c0_7 = arith.constant 0 : index
    %c0_8 = arith.constant 0 : index
    %10 = vector.load %arg6[%c0_7, %c0_8] : memref<1x256xf32, #tpu.memory_space<vmem>>, vector<1x256xf32>
    %cst_9 = arith.constant dense<0xFF800000> : vector<256xf32>
    %11 = vector.multi_reduction <maximumf>, %4, %cst_9 [0] : vector<4x256xf32> to vector<256xf32>
    %12 = vector.shape_cast %11 : vector<256xf32> to vector<1x256xf32>
    %13 = arith.maximumf %10, %12 : vector<1x256xf32>
    %c0_10 = arith.constant 0 : index
    %c0_11 = arith.constant 0 : index
    %14 = vector.load %arg6[%c0_10, %c0_11] : memref<1x256xf32, #tpu.memory_space<vmem>>, vector<1x256xf32>
    tpu.vector_store %arg6[%c0_10, %c0_11], %13 {strides = array<i32>} : memref<1x256xf32, #tpu.memory_space<vmem>>, vector<1x256xf32>,
    %c0_i32_12 = arith.constant 0 : i32
    %15 = arith.cmpi eq, %arg1, %c0_i32_12 : i32
    %16 = arith.extui %15 : i1 to i32
    %c0_i32_13 = arith.constant 0 : i32
    %17 = arith.cmpi ne, %16, %c0_i32_13 : i32
    scf.if %17 {
      %c0_14 = arith.constant 0 : index
      %c0_15 = arith.constant 0 : index
      %18 = vector.load %arg5[%c0_14, %c0_15] : memref<1x256xf32, #tpu.memory_space<vmem>>, vector<1x256xf32>
      %cst_16 = arith.constant 2.500000e-01 : f32
      %19 = vector.broadcast %cst_16 : f32 to vector<1x256xf32>
      %20 = arith.mulf %18, %19 : vector<1x256xf32>
      %c0_17 = arith.constant 0 : index
      %c0_18 = arith.constant 0 : index
      %21 = vector.load %arg6[%c0_17, %c0_18] : memref<1x256xf32, #tpu.memory_space<vmem>>, vector<1x256xf32>
      %22 = tpu.iota {dimensions = array<i32: 1>} : vector<1x256xi32>
      %c15_i32 = arith.constant 15 : i32
      %23 = vector.broadcast %c15_i32 : i32 to vector<1x256xi32>
      %24 = arith.andi %22, %23 : vector<1x256xi32>
      %c48_i32 = arith.constant 48 : i32
      %25 = vector.broadcast %c48_i32 : i32 to vector<1x256xi32>
      %26 = arith.cmpi sge, %22, %25 : vector<1x256xi32>
      %c256_i32 = arith.constant 256 : i32
      %27 = vector.broadcast %c256_i32 : i32 to vector<1x256xi32>
      %28 = arith.cmpi slt, %22, %27 : vector<1x256xi32>
      %29 = arith.andi %26, %28 : vector<1x256xi1>
      %c32_i32 = arith.constant 32 : i32
      %30 = vector.broadcast %c32_i32 : i32 to vector<1x256xi32>
      %31 = arith.cmpi sge, %22, %30 : vector<1x256xi32>
      %c256_i32_19 = arith.constant 256 : i32
      %32 = vector.broadcast %c256_i32_19 : i32 to vector<1x256xi32>
      %33 = arith.cmpi slt, %22, %32 : vector<1x256xi32>
      %34 = arith.andi %31, %33 : vector<1x256xi1>
      %c16_i32 = arith.constant 16 : i32
      %35 = vector.broadcast %c16_i32 : i32 to vector<1x256xi32>
      %36 = arith.cmpi sge, %22, %35 : vector<1x256xi32>
      %c256_i32_20 = arith.constant 256 : i32
      %37 = vector.broadcast %c256_i32_20 : i32 to vector<1x256xi32>
      %38 = arith.cmpi slt, %22, %37 : vector<1x256xi32>
      %39 = arith.andi %36, %38 : vector<1x256xi1>
      %c0_i32_21 = arith.constant 0 : i32
      %40 = vector.broadcast %c0_i32_21 : i32 to vector<1x256xi32>
      %41 = arith.cmpi sge, %22, %40 : vector<1x256xi32>
      %c256_i32_22 = arith.constant 256 : i32
      %42 = vector.broadcast %c256_i32_22 : i32 to vector<1x256xi32>
      %43 = arith.cmpi slt, %22, %42 : vector<1x256xi32>
      %44 = arith.andi %41, %43 : vector<1x256xi1>
      %c0_i32_23 = arith.constant 0 : i32
      %45 = vector.broadcast %c0_i32_23 : i32 to vector<1x256xi32>
      %46 = arith.cmpi sge, %22, %45 : vector<1x256xi32>
      %c240_i32 = arith.constant 240 : i32
      %47 = vector.broadcast %c240_i32 : i32 to vector<1x256xi32>
      %48 = arith.cmpi slt, %22, %47 : vector<1x256xi32>
      %49 = arith.andi %46, %48 : vector<1x256xi1>
      %c0_i32_24 = arith.constant 0 : i32
      %50 = vector.broadcast %c0_i32_24 : i32 to vector<1x256xi32>
      %51 = arith.cmpi sge, %22, %50 : vector<1x256xi32>
      %c224_i32 = arith.constant 224 : i32
      %52 = vector.broadcast %c224_i32 : i32 to vector<1x256xi32>
      %53 = arith.cmpi slt, %22, %52 : vector<1x256xi32>
      %54 = arith.andi %51, %53 : vector<1x256xi1>
      %c0_i32_25 = arith.constant 0 : i32
      %55 = vector.broadcast %c0_i32_25 : i32 to vector<1x256xi32>
      %56 = arith.cmpi sge, %22, %55 : vector<1x256xi32>
      %c208_i32 = arith.constant 208 : i32
      %57 = vector.broadcast %c208_i32 : i32 to vector<1x256xi32>
      %58 = arith.cmpi slt, %22, %57 : vector<1x256xi32>
      %59 = arith.andi %56, %58 : vector<1x256xi1>
      %c3_i32 = arith.constant 3 : i32
      %60 = vector.broadcast %c3_i32 : i32 to vector<1x256xi32>
      %61 = arith.cmpi sge, %24, %60 : vector<1x256xi32>
      %c16_i32_26 = arith.constant 16 : i32
      %62 = vector.broadcast %c16_i32_26 : i32 to vector<1x256xi32>
      %63 = arith.cmpi slt, %24, %62 : vector<1x256xi32>
      %64 = arith.andi %61, %63 : vector<1x256xi1>
      %c2_i32 = arith.constant 2 : i32
      %65 = vector.broadcast %c2_i32 : i32 to vector<1x256xi32>
      %66 = arith.cmpi sge, %24, %65 : vector<1x256xi32>
      %c16_i32_27 = arith.constant 16 : i32
      %67 = vector.broadcast %c16_i32_27 : i32 to vector<1x256xi32>
      %68 = arith.cmpi slt, %24, %67 : vector<1x256xi32>
      %69 = arith.andi %66, %68 : vector<1x256xi1>
      %c1_i32 = arith.constant 1 : i32
      %70 = vector.broadcast %c1_i32 : i32 to vector<1x256xi32>
      %71 = arith.cmpi sge, %24, %70 : vector<1x256xi32>
      %c16_i32_28 = arith.constant 16 : i32
      %72 = vector.broadcast %c16_i32_28 : i32 to vector<1x256xi32>
      %73 = arith.cmpi slt, %24, %72 : vector<1x256xi32>
      %74 = arith.andi %71, %73 : vector<1x256xi1>
      %c0_i32_29 = arith.constant 0 : i32
      %75 = vector.broadcast %c0_i32_29 : i32 to vector<1x256xi32>
      %76 = arith.cmpi sge, %24, %75 : vector<1x256xi32>
      %c16_i32_30 = arith.constant 16 : i32
      %77 = vector.broadcast %c16_i32_30 : i32 to vector<1x256xi32>
      %78 = arith.cmpi slt, %24, %77 : vector<1x256xi32>
      %79 = arith.andi %76, %78 : vector<1x256xi1>
      %c0_i32_31 = arith.constant 0 : i32
      %80 = vector.broadcast %c0_i32_31 : i32 to vector<1x256xi32>
      %81 = arith.cmpi sge, %24, %80 : vector<1x256xi32>
      %c15_i32_32 = arith.constant 15 : i32
      %82 = vector.broadcast %c15_i32_32 : i32 to vector<1x256xi32>
      %83 = arith.cmpi slt, %24, %82 : vector<1x256xi32>
      %84 = arith.andi %81, %83 : vector<1x256xi1>
      %c0_i32_33 = arith.constant 0 : i32
      %85 = vector.broadcast %c0_i32_33 : i32 to vector<1x256xi32>
      %86 = arith.cmpi sge, %24, %85 : vector<1x256xi32>
      %c14_i32 = arith.constant 14 : i32
      %87 = vector.broadcast %c14_i32 : i32 to vector<1x256xi32>
      %88 = arith.cmpi slt, %24, %87 : vector<1x256xi32>
      %89 = arith.andi %86, %88 : vector<1x256xi1>
      %c0_i32_34 = arith.constant 0 : i32
      %90 = vector.broadcast %c0_i32_34 : i32 to vector<1x256xi32>
      %91 = arith.cmpi sge, %24, %90 : vector<1x256xi32>
      %c13_i32 = arith.constant 13 : i32
      %92 = vector.broadcast %c13_i32 : i32 to vector<1x256xi32>
      %93 = arith.cmpi slt, %24, %92 : vector<1x256xi32>
      %94 = arith.andi %91, %93 : vector<1x256xi1>
      %cst_35 = arith.constant 0.000000e+00 : f32
      %95 = vector.broadcast %cst_35 : f32 to vector<1x256xf32>
      %cst_36 = arith.constant 0.000000e+00 : f32
      %96 = vector.broadcast %cst_36 : f32 to vector<1x256xf32>
      %cst_37 = arith.constant 0.000000e+00 : f32
      %97 = vector.broadcast %cst_37 : f32 to vector<1x256xf32>
      %cst_38 = arith.constant 0.000000e+00 : f32
      %98 = vector.broadcast %cst_38 : f32 to vector<1x256xf32>
      %c51_i32 = arith.constant 51 : i32
      %99 = tpu.dynamic_rotate %20 by %c51_i32 dim 1 : vector<1x256xf32>, i32 -> vector<1x256xf32>
      %c51_i32_39 = arith.constant 51 : i32
      %100 = tpu.dynamic_rotate %21 by %c51_i32_39 dim 1 : vector<1x256xf32>, i32 -> vector<1x256xf32>
      %c0_40 = arith.constant 0 : index
      %101 = memref.load %arg3[%c0_40] : memref<98xf32, #tpu.memory_space<smem>>
      %102 = vector.broadcast %101 : f32 to vector<1x256xf32>
      %103 = arith.mulf %102, %99 : vector<1x256xf32>
      %c49 = arith.constant 49 : index
      %104 = memref.load %arg3[%c49] : memref<98xf32, #tpu.memory_space<smem>>
      %105 = vector.broadcast %104 : f32 to vector<1x256xf32>
      %106 = arith.mulf %105, %100 : vector<1x256xf32>
      %107 = arith.addf %103, %106 : vector<1x256xf32>
      %108 = arith.andi %29, %64 : vector<1x256xi1>
      %cst_41 = arith.constant 0.000000e+00 : f32
      %109 = vector.broadcast %cst_41 : f32 to vector<1x256xf32>
      %110 = arith.select %108, %107, %109 : vector<1x256xi1>, vector<1x256xf32>
      %111 = arith.addf %95, %110 : vector<1x256xf32>
      %c50_i32 = arith.constant 50 : i32
      %112 = tpu.dynamic_rotate %20 by %c50_i32 dim 1 : vector<1x256xf32>, i32 -> vector<1x256xf32>
      %c50_i32_42 = arith.constant 50 : i32
      %113 = tpu.dynamic_rotate %21 by %c50_i32_42 dim 1 : vector<1x256xf32>, i32 -> vector<1x256xf32>
      %c1 = arith.constant 1 : index
      %114 = memref.load %arg3[%c1] : memref<98xf32, #tpu.memory_space<smem>>
      %115 = vector.broadcast %114 : f32 to vector<1x256xf32>
      %116 = arith.mulf %115, %112 : vector<1x256xf32>
      %c50 = arith.constant 50 : index
      %117 = memref.load %arg3[%c50] : memref<98xf32, #tpu.memory_space<smem>>
      %118 = vector.broadcast %117 : f32 to vector<1x256xf32>
      %119 = arith.mulf %118, %113 : vector<1x256xf32>
      %120 = arith.addf %116, %119 : vector<1x256xf32>
      %121 = arith.andi %29, %69 : vector<1x256xi1>
      %cst_43 = arith.constant 0.000000e+00 : f32
      %122 = vector.broadcast %cst_43 : f32 to vector<1x256xf32>
      %123 = arith.select %121, %120, %122 : vector<1x256xi1>, vector<1x256xf32>
      %124 = arith.addf %96, %123 : vector<1x256xf32>
      %c49_i32 = arith.constant 49 : i32
      %125 = tpu.dynamic_rotate %20 by %c49_i32 dim 1 : vector<1x256xf32>, i32 -> vector<1x256xf32>
      %c49_i32_44 = arith.constant 49 : i32
      %126 = tpu.dynamic_rotate %21 by %c49_i32_44 dim 1 : vector<1x256xf32>, i32 -> vector<1x256xf32>
      %c2 = arith.constant 2 : index
      %127 = memref.load %arg3[%c2] : memref<98xf32, #tpu.memory_space<smem>>
      %128 = vector.broadcast %127 : f32 to vector<1x256xf32>
      %129 = arith.mulf %128, %125 : vector<1x256xf32>
      %c51 = arith.constant 51 : index
      %130 = memref.load %arg3[%c51] : memref<98xf32, #tpu.memory_space<smem>>
      %131 = vector.broadcast %130 : f32 to vector<1x256xf32>
      %132 = arith.mulf %131, %126 : vector<1x256xf32>
      %133 = arith.addf %129, %132 : vector<1x256xf32>
      %134 = arith.andi %29, %74 : vector<1x256xi1>
      %cst_45 = arith.constant 0.000000e+00 : f32
      %135 = vector.broadcast %cst_45 : f32 to vector<1x256xf32>
      %136 = arith.select %134, %133, %135 : vector<1x256xi1>, vector<1x256xf32>
      %137 = arith.addf %97, %136 : vector<1x256xf32>
      %c48_i32_46 = arith.constant 48 : i32
      %138 = tpu.dynamic_rotate %20 by %c48_i32_46 dim 1 : vector<1x256xf32>, i32 -> vector<1x256xf32>
      %c48_i32_47 = arith.constant 48 : i32
      %139 = tpu.dynamic_rotate %21 by %c48_i32_47 dim 1 : vector<1x256xf32>, i32 -> vector<1x256xf32>
      %c3 = arith.constant 3 : index
      %140 = memref.load %arg3[%c3] : memref<98xf32, #tpu.memory_space<smem>>
      %141 = vector.broadcast %140 : f32 to vector<1x256xf32>
      %142 = arith.mulf %141, %138 : vector<1x256xf32>
      %c52 = arith.constant 52 : index
      %143 = memref.load %arg3[%c52] : memref<98xf32, #tpu.memory_space<smem>>
      %144 = vector.broadcast %143 : f32 to vector<1x256xf32>
      %145 = arith.mulf %144, %139 : vector<1x256xf32>
      %146 = arith.addf %142, %145 : vector<1x256xf32>
      %147 = arith.andi %29, %79 : vector<1x256xi1>
      %cst_48 = arith.constant 0.000000e+00 : f32
      %148 = vector.broadcast %cst_48 : f32 to vector<1x256xf32>
      %149 = arith.select %147, %146, %148 : vector<1x256xi1>, vector<1x256xf32>
      %150 = arith.addf %98, %149 : vector<1x256xf32>
      %c47_i32 = arith.constant 47 : i32
      %151 = tpu.dynamic_rotate %20 by %c47_i32 dim 1 : vector<1x256xf32>, i32 -> vector<1x256xf32>
      %c47_i32_49 = arith.constant 47 : i32
      %152 = tpu.dynamic_rotate %21 by %c47_i32_49 dim 1 : vector<1x256xf32>, i32 -> vector<1x256xf32>
      %c4 = arith.constant 4 : index
      %153 = memref.load %arg3[%c4] : memref<98xf32, #tpu.memory_space<smem>>
      %154 = vector.broadcast %153 : f32 to vector<1x256xf32>
      %155 = arith.mulf %154, %151 : vector<1x256xf32>
      %c53 = arith.constant 53 : index
      %156 = memref.load %arg3[%c53] : memref<98xf32, #tpu.memory_space<smem>>
      %157 = vector.broadcast %156 : f32 to vector<1x256xf32>
      %158 = arith.mulf %157, %152 : vector<1x256xf32>
      %159 = arith.addf %155, %158 : vector<1x256xf32>
      %160 = arith.andi %29, %84 : vector<1x256xi1>
      %cst_50 = arith.constant 0.000000e+00 : f32
      %161 = vector.broadcast %cst_50 : f32 to vector<1x256xf32>
      %162 = arith.select %160, %159, %161 : vector<1x256xi1>, vector<1x256xf32>
      %163 = arith.addf %111, %162 : vector<1x256xf32>
      %c46_i32 = arith.constant 46 : i32
      %164 = tpu.dynamic_rotate %20 by %c46_i32 dim 1 : vector<1x256xf32>, i32 -> vector<1x256xf32>
      %c46_i32_51 = arith.constant 46 : i32
      %165 = tpu.dynamic_rotate %21 by %c46_i32_51 dim 1 : vector<1x256xf32>, i32 -> vector<1x256xf32>
      %c5 = arith.constant 5 : index
      %166 = memref.load %arg3[%c5] : memref<98xf32, #tpu.memory_space<smem>>
      %167 = vector.broadcast %166 : f32 to vector<1x256xf32>
      %168 = arith.mulf %167, %164 : vector<1x256xf32>
      %c54 = arith.constant 54 : index
      %169 = memref.load %arg3[%c54] : memref<98xf32, #tpu.memory_space<smem>>
      %170 = vector.broadcast %169 : f32 to vector<1x256xf32>
      %171 = arith.mulf %170, %165 : vector<1x256xf32>
      %172 = arith.addf %168, %171 : vector<1x256xf32>
      %173 = arith.andi %29, %89 : vector<1x256xi1>
      %cst_52 = arith.constant 0.000000e+00 : f32
      %174 = vector.broadcast %cst_52 : f32 to vector<1x256xf32>
      %175 = arith.select %173, %172, %174 : vector<1x256xi1>, vector<1x256xf32>
      %176 = arith.addf %124, %175 : vector<1x256xf32>
      %c45_i32 = arith.constant 45 : i32
      %177 = tpu.dynamic_rotate %20 by %c45_i32 dim 1 : vector<1x256xf32>, i32 -> vector<1x256xf32>
      %c45_i32_53 = arith.constant 45 : i32
      %178 = tpu.dynamic_rotate %21 by %c45_i32_53 dim 1 : vector<1x256xf32>, i32 -> vector<1x256xf32>
      %c6 = arith.constant 6 : index
      %179 = memref.load %arg3[%c6] : memref<98xf32, #tpu.memory_space<smem>>
      %180 = vector.broadcast %179 : f32 to vector<1x256xf32>
      %181 = arith.mulf %180, %177 : vector<1x256xf32>
      %c55 = arith.constant 55 : index
      %182 = memref.load %arg3[%c55] : memref<98xf32, #tpu.memory_space<smem>>
      %183 = vector.broadcast %182 : f32 to vector<1x256xf32>
      %184 = arith.mulf %183, %178 : vector<1x256xf32>
      %185 = arith.addf %181, %184 : vector<1x256xf32>
      %186 = arith.andi %29, %94 : vector<1x256xi1>
      %cst_54 = arith.constant 0.000000e+00 : f32
      %187 = vector.broadcast %cst_54 : f32 to vector<1x256xf32>
      %188 = arith.select %186, %185, %187 : vector<1x256xi1>, vector<1x256xf32>
      %189 = arith.addf %137, %188 : vector<1x256xf32>
      %c35_i32 = arith.constant 35 : i32
      %190 = tpu.dynamic_rotate %20 by %c35_i32 dim 1 : vector<1x256xf32>, i32 -> vector<1x256xf32>
      %c35_i32_55 = arith.constant 35 : i32
      %191 = tpu.dynamic_rotate %21 by %c35_i32_55 dim 1 : vector<1x256xf32>, i32 -> vector<1x256xf32>
      %c7 = arith.constant 7 : index
      %192 = memref.load %arg3[%c7] : memref<98xf32, #tpu.memory_space<smem>>
      %193 = vector.broadcast %192 : f32 to vector<1x256xf32>
      %194 = arith.mulf %193, %190 : vector<1x256xf32>
      %c56 = arith.constant 56 : index
      %195 = memref.load %arg3[%c56] : memref<98xf32, #tpu.memory_space<smem>>
      %196 = vector.broadcast %195 : f32 to vector<1x256xf32>
      %197 = arith.mulf %196, %191 : vector<1x256xf32>
      %198 = arith.addf %194, %197 : vector<1x256xf32>
      %199 = arith.andi %34, %64 : vector<1x256xi1>
      %cst_56 = arith.constant 0.000000e+00 : f32
      %200 = vector.broadcast %cst_56 : f32 to vector<1x256xf32>
      %201 = arith.select %199, %198, %200 : vector<1x256xi1>, vector<1x256xf32>
      %202 = arith.addf %150, %201 : vector<1x256xf32>
      %c34_i32 = arith.constant 34 : i32
      %203 = tpu.dynamic_rotate %20 by %c34_i32 dim 1 : vector<1x256xf32>, i32 -> vector<1x256xf32>
      %c34_i32_57 = arith.constant 34 : i32
      %204 = tpu.dynamic_rotate %21 by %c34_i32_57 dim 1 : vector<1x256xf32>, i32 -> vector<1x256xf32>
      %c8 = arith.constant 8 : index
      %205 = memref.load %arg3[%c8] : memref<98xf32, #tpu.memory_space<smem>>
      %206 = vector.broadcast %205 : f32 to vector<1x256xf32>
      %207 = arith.mulf %206, %203 : vector<1x256xf32>
      %c57 = arith.constant 57 : index
      %208 = memref.load %arg3[%c57] : memref<98xf32, #tpu.memory_space<smem>>
      %209 = vector.broadcast %208 : f32 to vector<1x256xf32>
      %210 = arith.mulf %209, %204 : vector<1x256xf32>
      %211 = arith.addf %207, %210 : vector<1x256xf32>
      %212 = arith.andi %34, %69 : vector<1x256xi1>
      %cst_58 = arith.constant 0.000000e+00 : f32
      %213 = vector.broadcast %cst_58 : f32 to vector<1x256xf32>
      %214 = arith.select %212, %211, %213 : vector<1x256xi1>, vector<1x256xf32>
      %215 = arith.addf %163, %214 : vector<1x256xf32>
      %c33_i32 = arith.constant 33 : i32
      %216 = tpu.dynamic_rotate %20 by %c33_i32 dim 1 : vector<1x256xf32>, i32 -> vector<1x256xf32>
      %c33_i32_59 = arith.constant 33 : i32
      %217 = tpu.dynamic_rotate %21 by %c33_i32_59 dim 1 : vector<1x256xf32>, i32 -> vector<1x256xf32>
      %c9 = arith.constant 9 : index
      %218 = memref.load %arg3[%c9] : memref<98xf32, #tpu.memory_space<smem>>
      %219 = vector.broadcast %218 : f32 to vector<1x256xf32>
      %220 = arith.mulf %219, %216 : vector<1x256xf32>
      %c58 = arith.constant 58 : index
      %221 = memref.load %arg3[%c58] : memref<98xf32, #tpu.memory_space<smem>>
      %222 = vector.broadcast %221 : f32 to vector<1x256xf32>
      %223 = arith.mulf %222, %217 : vector<1x256xf32>
      %224 = arith.addf %220, %223 : vector<1x256xf32>
      %225 = arith.andi %34, %74 : vector<1x256xi1>
      %cst_60 = arith.constant 0.000000e+00 : f32
      %226 = vector.broadcast %cst_60 : f32 to vector<1x256xf32>
      %227 = arith.select %225, %224, %226 : vector<1x256xi1>, vector<1x256xf32>
      %228 = arith.addf %176, %227 : vector<1x256xf32>
      %c32_i32_61 = arith.constant 32 : i32
      %229 = tpu.dynamic_rotate %20 by %c32_i32_61 dim 1 : vector<1x256xf32>, i32 -> vector<1x256xf32>
      %c32_i32_62 = arith.constant 32 : i32
      %230 = tpu.dynamic_rotate %21 by %c32_i32_62 dim 1 : vector<1x256xf32>, i32 -> vector<1x256xf32>
      %c10 = arith.constant 10 : index
      %231 = memref.load %arg3[%c10] : memref<98xf32, #tpu.memory_space<smem>>
      %232 = vector.broadcast %231 : f32 to vector<1x256xf32>
      %233 = arith.mulf %232, %229 : vector<1x256xf32>
      %c59 = arith.constant 59 : index
      %234 = memref.load %arg3[%c59] : memref<98xf32, #tpu.memory_space<smem>>
      %235 = vector.broadcast %234 : f32 to vector<1x256xf32>
      %236 = arith.mulf %235, %230 : vector<1x256xf32>
      %237 = arith.addf %233, %236 : vector<1x256xf32>
      %238 = arith.andi %34, %79 : vector<1x256xi1>
      %cst_63 = arith.constant 0.000000e+00 : f32
      %239 = vector.broadcast %cst_63 : f32 to vector<1x256xf32>
      %240 = arith.select %238, %237, %239 : vector<1x256xi1>, vector<1x256xf32>
      %241 = arith.addf %189, %240 : vector<1x256xf32>
      %c31_i32 = arith.constant 31 : i32
      %242 = tpu.dynamic_rotate %20 by %c31_i32 dim 1 : vector<1x256xf32>, i32 -> vector<1x256xf32>
      %c31_i32_64 = arith.constant 31 : i32
      %243 = tpu.dynamic_rotate %21 by %c31_i32_64 dim 1 : vector<1x256xf32>, i32 -> vector<1x256xf32>
      %c11 = arith.constant 11 : index
      %244 = memref.load %arg3[%c11] : memref<98xf32, #tpu.memory_space<smem>>
      %245 = vector.broadcast %244 : f32 to vector<1x256xf32>
      %246 = arith.mulf %245, %242 : vector<1x256xf32>
      %c60 = arith.constant 60 : index
      %247 = memref.load %arg3[%c60] : memref<98xf32, #tpu.memory_space<smem>>
      %248 = vector.broadcast %247 : f32 to vector<1x256xf32>
      %249 = arith.mulf %248, %243 : vector<1x256xf32>
      %250 = arith.addf %246, %249 : vector<1x256xf32>
      %251 = arith.andi %34, %84 : vector<1x256xi1>
      %cst_65 = arith.constant 0.000000e+00 : f32
      %252 = vector.broadcast %cst_65 : f32 to vector<1x256xf32>
      %253 = arith.select %251, %250, %252 : vector<1x256xi1>, vector<1x256xf32>
      %254 = arith.addf %202, %253 : vector<1x256xf32>
      %c30_i32 = arith.constant 30 : i32
      %255 = tpu.dynamic_rotate %20 by %c30_i32 dim 1 : vector<1x256xf32>, i32 -> vector<1x256xf32>
      %c30_i32_66 = arith.constant 30 : i32
      %256 = tpu.dynamic_rotate %21 by %c30_i32_66 dim 1 : vector<1x256xf32>, i32 -> vector<1x256xf32>
      %c12 = arith.constant 12 : index
      %257 = memref.load %arg3[%c12] : memref<98xf32, #tpu.memory_space<smem>>
      %258 = vector.broadcast %257 : f32 to vector<1x256xf32>
      %259 = arith.mulf %258, %255 : vector<1x256xf32>
      %c61 = arith.constant 61 : index
      %260 = memref.load %arg3[%c61] : memref<98xf32, #tpu.memory_space<smem>>
      %261 = vector.broadcast %260 : f32 to vector<1x256xf32>
      %262 = arith.mulf %261, %256 : vector<1x256xf32>
      %263 = arith.addf %259, %262 : vector<1x256xf32>
      %264 = arith.andi %34, %89 : vector<1x256xi1>
      %cst_67 = arith.constant 0.000000e+00 : f32
      %265 = vector.broadcast %cst_67 : f32 to vector<1x256xf32>
      %266 = arith.select %264, %263, %265 : vector<1x256xi1>, vector<1x256xf32>
      %267 = arith.addf %215, %266 : vector<1x256xf32>
      %c29_i32 = arith.constant 29 : i32
      %268 = tpu.dynamic_rotate %20 by %c29_i32 dim 1 : vector<1x256xf32>, i32 -> vector<1x256xf32>
      %c29_i32_68 = arith.constant 29 : i32
      %269 = tpu.dynamic_rotate %21 by %c29_i32_68 dim 1 : vector<1x256xf32>, i32 -> vector<1x256xf32>
      %c13 = arith.constant 13 : index
      %270 = memref.load %arg3[%c13] : memref<98xf32, #tpu.memory_space<smem>>
      %271 = vector.broadcast %270 : f32 to vector<1x256xf32>
      %272 = arith.mulf %271, %268 : vector<1x256xf32>
      %c62 = arith.constant 62 : index
      %273 = memref.load %arg3[%c62] : memref<98xf32, #tpu.memory_space<smem>>
      %274 = vector.broadcast %273 : f32 to vector<1x256xf32>
      %275 = arith.mulf %274, %269 : vector<1x256xf32>
      %276 = arith.addf %272, %275 : vector<1x256xf32>
      %277 = arith.andi %34, %94 : vector<1x256xi1>
      %cst_69 = arith.constant 0.000000e+00 : f32
      %278 = vector.broadcast %cst_69 : f32 to vector<1x256xf32>
      %279 = arith.select %277, %276, %278 : vector<1x256xi1>, vector<1x256xf32>
      %280 = arith.addf %228, %279 : vector<1x256xf32>
      %c19_i32 = arith.constant 19 : i32
      %281 = tpu.dynamic_rotate %20 by %c19_i32 dim 1 : vector<1x256xf32>, i32 -> vector<1x256xf32>
      %c19_i32_70 = arith.constant 19 : i32
      %282 = tpu.dynamic_rotate %21 by %c19_i32_70 dim 1 : vector<1x256xf32>, i32 -> vector<1x256xf32>
      %c14 = arith.constant 14 : index
      %283 = memref.load %arg3[%c14] : memref<98xf32, #tpu.memory_space<smem>>
      %284 = vector.broadcast %283 : f32 to vector<1x256xf32>
      %285 = arith.mulf %284, %281 : vector<1x256xf32>
      %c63 = arith.constant 63 : index
      %286 = memref.load %arg3[%c63] : memref<98xf32, #tpu.memory_space<smem>>
      %287 = vector.broadcast %286 : f32 to vector<1x256xf32>
      %288 = arith.mulf %287, %282 : vector<1x256xf32>
      %289 = arith.addf %285, %288 : vector<1x256xf32>
      %290 = arith.andi %39, %64 : vector<1x256xi1>
      %cst_71 = arith.constant 0.000000e+00 : f32
      %291 = vector.broadcast %cst_71 : f32 to vector<1x256xf32>
      %292 = arith.select %290, %289, %291 : vector<1x256xi1>, vector<1x256xf32>
      %293 = arith.addf %241, %292 : vector<1x256xf32>
      %c18_i32 = arith.constant 18 : i32
      %294 = tpu.dynamic_rotate %20 by %c18_i32 dim 1 : vector<1x256xf32>, i32 -> vector<1x256xf32>
      %c18_i32_72 = arith.constant 18 : i32
      %295 = tpu.dynamic_rotate %21 by %c18_i32_72 dim 1 : vector<1x256xf32>, i32 -> vector<1x256xf32>
      %c15 = arith.constant 15 : index
      %296 = memref.load %arg3[%c15] : memref<98xf32, #tpu.memory_space<smem>>
      %297 = vector.broadcast %296 : f32 to vector<1x256xf32>
      %298 = arith.mulf %297, %294 : vector<1x256xf32>
      %c64 = arith.constant 64 : index
      %299 = memref.load %arg3[%c64] : memref<98xf32, #tpu.memory_space<smem>>
      %300 = vector.broadcast %299 : f32 to vector<1x256xf32>
      %301 = arith.mulf %300, %295 : vector<1x256xf32>
      %302 = arith.addf %298, %301 : vector<1x256xf32>
      %303 = arith.andi %39, %69 : vector<1x256xi1>
      %cst_73 = arith.constant 0.000000e+00 : f32
      %304 = vector.broadcast %cst_73 : f32 to vector<1x256xf32>
      %305 = arith.select %303, %302, %304 : vector<1x256xi1>, vector<1x256xf32>
      %306 = arith.addf %254, %305 : vector<1x256xf32>
      %c17_i32 = arith.constant 17 : i32
      %307 = tpu.dynamic_rotate %20 by %c17_i32 dim 1 : vector<1x256xf32>, i32 -> vector<1x256xf32>
      %c17_i32_74 = arith.constant 17 : i32
      %308 = tpu.dynamic_rotate %21 by %c17_i32_74 dim 1 : vector<1x256xf32>, i32 -> vector<1x256xf32>
      %c16 = arith.constant 16 : index
      %309 = memref.load %arg3[%c16] : memref<98xf32, #tpu.memory_space<smem>>
      %310 = vector.broadcast %309 : f32 to vector<1x256xf32>
      %311 = arith.mulf %310, %307 : vector<1x256xf32>
      %c65 = arith.constant 65 : index
      %312 = memref.load %arg3[%c65] : memref<98xf32, #tpu.memory_space<smem>>
      %313 = vector.broadcast %312 : f32 to vector<1x256xf32>
      %314 = arith.mulf %313, %308 : vector<1x256xf32>
      %315 = arith.addf %311, %314 : vector<1x256xf32>
      %316 = arith.andi %39, %74 : vector<1x256xi1>
      %cst_75 = arith.constant 0.000000e+00 : f32
      %317 = vector.broadcast %cst_75 : f32 to vector<1x256xf32>
      %318 = arith.select %316, %315, %317 : vector<1x256xi1>, vector<1x256xf32>
      %319 = arith.addf %267, %318 : vector<1x256xf32>
      %c16_i32_76 = arith.constant 16 : i32
      %320 = tpu.dynamic_rotate %20 by %c16_i32_76 dim 1 : vector<1x256xf32>, i32 -> vector<1x256xf32>
      %c16_i32_77 = arith.constant 16 : i32
      %321 = tpu.dynamic_rotate %21 by %c16_i32_77 dim 1 : vector<1x256xf32>, i32 -> vector<1x256xf32>
      %c17 = arith.constant 17 : index
      %322 = memref.load %arg3[%c17] : memref<98xf32, #tpu.memory_space<smem>>
      %323 = vector.broadcast %322 : f32 to vector<1x256xf32>
      %324 = arith.mulf %323, %320 : vector<1x256xf32>
      %c66 = arith.constant 66 : index
      %325 = memref.load %arg3[%c66] : memref<98xf32, #tpu.memory_space<smem>>
      %326 = vector.broadcast %325 : f32 to vector<1x256xf32>
      %327 = arith.mulf %326, %321 : vector<1x256xf32>
      %328 = arith.addf %324, %327 : vector<1x256xf32>
      %329 = arith.andi %39, %79 : vector<1x256xi1>
      %cst_78 = arith.constant 0.000000e+00 : f32
      %330 = vector.broadcast %cst_78 : f32 to vector<1x256xf32>
      %331 = arith.select %329, %328, %330 : vector<1x256xi1>, vector<1x256xf32>
      %332 = arith.addf %280, %331 : vector<1x256xf32>
      %c15_i32_79 = arith.constant 15 : i32
      %333 = tpu.dynamic_rotate %20 by %c15_i32_79 dim 1 : vector<1x256xf32>, i32 -> vector<1x256xf32>
      %c15_i32_80 = arith.constant 15 : i32
      %334 = tpu.dynamic_rotate %21 by %c15_i32_80 dim 1 : vector<1x256xf32>, i32 -> vector<1x256xf32>
      %c18 = arith.constant 18 : index
      %335 = memref.load %arg3[%c18] : memref<98xf32, #tpu.memory_space<smem>>
      %336 = vector.broadcast %335 : f32 to vector<1x256xf32>
      %337 = arith.mulf %336, %333 : vector<1x256xf32>
      %c67 = arith.constant 67 : index
      %338 = memref.load %arg3[%c67] : memref<98xf32, #tpu.memory_space<smem>>
      %339 = vector.broadcast %338 : f32 to vector<1x256xf32>
      %340 = arith.mulf %339, %334 : vector<1x256xf32>
      %341 = arith.addf %337, %340 : vector<1x256xf32>
      %342 = arith.andi %39, %84 : vector<1x256xi1>
      %cst_81 = arith.constant 0.000000e+00 : f32
      %343 = vector.broadcast %cst_81 : f32 to vector<1x256xf32>
      %344 = arith.select %342, %341, %343 : vector<1x256xi1>, vector<1x256xf32>
      %345 = arith.addf %293, %344 : vector<1x256xf32>
      %c14_i32_82 = arith.constant 14 : i32
      %346 = tpu.dynamic_rotate %20 by %c14_i32_82 dim 1 : vector<1x256xf32>, i32 -> vector<1x256xf32>
      %c14_i32_83 = arith.constant 14 : i32
      %347 = tpu.dynamic_rotate %21 by %c14_i32_83 dim 1 : vector<1x256xf32>, i32 -> vector<1x256xf32>
      %c19 = arith.constant 19 : index
      %348 = memref.load %arg3[%c19] : memref<98xf32, #tpu.memory_space<smem>>
      %349 = vector.broadcast %348 : f32 to vector<1x256xf32>
      %350 = arith.mulf %349, %346 : vector<1x256xf32>
      %c68 = arith.constant 68 : index
      %351 = memref.load %arg3[%c68] : memref<98xf32, #tpu.memory_space<smem>>
      %352 = vector.broadcast %351 : f32 to vector<1x256xf32>
      %353 = arith.mulf %352, %347 : vector<1x256xf32>
      %354 = arith.addf %350, %353 : vector<1x256xf32>
      %355 = arith.andi %39, %89 : vector<1x256xi1>
      %cst_84 = arith.constant 0.000000e+00 : f32
      %356 = vector.broadcast %cst_84 : f32 to vector<1x256xf32>
      %357 = arith.select %355, %354, %356 : vector<1x256xi1>, vector<1x256xf32>
      %358 = arith.addf %306, %357 : vector<1x256xf32>
      %c13_i32_85 = arith.constant 13 : i32
      %359 = tpu.dynamic_rotate %20 by %c13_i32_85 dim 1 : vector<1x256xf32>, i32 -> vector<1x256xf32>
      %c13_i32_86 = arith.constant 13 : i32
      %360 = tpu.dynamic_rotate %21 by %c13_i32_86 dim 1 : vector<1x256xf32>, i32 -> vector<1x256xf32>
      %c20 = arith.constant 20 : index
      %361 = memref.load %arg3[%c20] : memref<98xf32, #tpu.memory_space<smem>>
      %362 = vector.broadcast %361 : f32 to vector<1x256xf32>
      %363 = arith.mulf %362, %359 : vector<1x256xf32>
      %c69 = arith.constant 69 : index
      %364 = memref.load %arg3[%c69] : memref<98xf32, #tpu.memory_space<smem>>
      %365 = vector.broadcast %364 : f32 to vector<1x256xf32>
      %366 = arith.mulf %365, %360 : vector<1x256xf32>
      %367 = arith.addf %363, %366 : vector<1x256xf32>
      %368 = arith.andi %39, %94 : vector<1x256xi1>
      %cst_87 = arith.constant 0.000000e+00 : f32
      %369 = vector.broadcast %cst_87 : f32 to vector<1x256xf32>
      %370 = arith.select %368, %367, %369 : vector<1x256xi1>, vector<1x256xf32>
      %371 = arith.addf %319, %370 : vector<1x256xf32>
      %c3_i32_88 = arith.constant 3 : i32
      %372 = tpu.dynamic_rotate %20 by %c3_i32_88 dim 1 : vector<1x256xf32>, i32 -> vector<1x256xf32>
      %c3_i32_89 = arith.constant 3 : i32
      %373 = tpu.dynamic_rotate %21 by %c3_i32_89 dim 1 : vector<1x256xf32>, i32 -> vector<1x256xf32>
      %c21 = arith.constant 21 : index
      %374 = memref.load %arg3[%c21] : memref<98xf32, #tpu.memory_space<smem>>
      %375 = vector.broadcast %374 : f32 to vector<1x256xf32>
      %376 = arith.mulf %375, %372 : vector<1x256xf32>
      %c70 = arith.constant 70 : index
      %377 = memref.load %arg3[%c70] : memref<98xf32, #tpu.memory_space<smem>>
      %378 = vector.broadcast %377 : f32 to vector<1x256xf32>
      %379 = arith.mulf %378, %373 : vector<1x256xf32>
      %380 = arith.addf %376, %379 : vector<1x256xf32>
      %381 = arith.andi %44, %64 : vector<1x256xi1>
      %cst_90 = arith.constant 0.000000e+00 : f32
      %382 = vector.broadcast %cst_90 : f32 to vector<1x256xf32>
      %383 = arith.select %381, %380, %382 : vector<1x256xi1>, vector<1x256xf32>
      %384 = arith.addf %332, %383 : vector<1x256xf32>
      %c2_i32_91 = arith.constant 2 : i32
      %385 = tpu.dynamic_rotate %20 by %c2_i32_91 dim 1 : vector<1x256xf32>, i32 -> vector<1x256xf32>
      %c2_i32_92 = arith.constant 2 : i32
      %386 = tpu.dynamic_rotate %21 by %c2_i32_92 dim 1 : vector<1x256xf32>, i32 -> vector<1x256xf32>
      %c22 = arith.constant 22 : index
      %387 = memref.load %arg3[%c22] : memref<98xf32, #tpu.memory_space<smem>>
      %388 = vector.broadcast %387 : f32 to vector<1x256xf32>
      %389 = arith.mulf %388, %385 : vector<1x256xf32>
      %c71 = arith.constant 71 : index
      %390 = memref.load %arg3[%c71] : memref<98xf32, #tpu.memory_space<smem>>
      %391 = vector.broadcast %390 : f32 to vector<1x256xf32>
      %392 = arith.mulf %391, %386 : vector<1x256xf32>
      %393 = arith.addf %389, %392 : vector<1x256xf32>
      %394 = arith.andi %44, %69 : vector<1x256xi1>
      %cst_93 = arith.constant 0.000000e+00 : f32
      %395 = vector.broadcast %cst_93 : f32 to vector<1x256xf32>
      %396 = arith.select %394, %393, %395 : vector<1x256xi1>, vector<1x256xf32>
      %397 = arith.addf %345, %396 : vector<1x256xf32>
      %c1_i32_94 = arith.constant 1 : i32
      %398 = tpu.dynamic_rotate %20 by %c1_i32_94 dim 1 : vector<1x256xf32>, i32 -> vector<1x256xf32>
      %c1_i32_95 = arith.constant 1 : i32
      %399 = tpu.dynamic_rotate %21 by %c1_i32_95 dim 1 : vector<1x256xf32>, i32 -> vector<1x256xf32>
      %c23 = arith.constant 23 : index
      %400 = memref.load %arg3[%c23] : memref<98xf32, #tpu.memory_space<smem>>
      %401 = vector.broadcast %400 : f32 to vector<1x256xf32>
      %402 = arith.mulf %401, %398 : vector<1x256xf32>
      %c72 = arith.constant 72 : index
      %403 = memref.load %arg3[%c72] : memref<98xf32, #tpu.memory_space<smem>>
      %404 = vector.broadcast %403 : f32 to vector<1x256xf32>
      %405 = arith.mulf %404, %399 : vector<1x256xf32>
      %406 = arith.addf %402, %405 : vector<1x256xf32>
      %407 = arith.andi %44, %74 : vector<1x256xi1>
      %cst_96 = arith.constant 0.000000e+00 : f32
      %408 = vector.broadcast %cst_96 : f32 to vector<1x256xf32>
      %409 = arith.select %407, %406, %408 : vector<1x256xi1>, vector<1x256xf32>
      %410 = arith.addf %358, %409 : vector<1x256xf32>
      %c24 = arith.constant 24 : index
      %411 = memref.load %arg3[%c24] : memref<98xf32, #tpu.memory_space<smem>>
      %412 = vector.broadcast %411 : f32 to vector<1x256xf32>
      %413 = arith.mulf %412, %20 : vector<1x256xf32>
      %c73 = arith.constant 73 : index
      %414 = memref.load %arg3[%c73] : memref<98xf32, #tpu.memory_space<smem>>
      %415 = vector.broadcast %414 : f32 to vector<1x256xf32>
      %416 = arith.mulf %415, %21 : vector<1x256xf32>
      %417 = arith.addf %413, %416 : vector<1x256xf32>
      %418 = arith.andi %44, %79 : vector<1x256xi1>
      %cst_97 = arith.constant 0.000000e+00 : f32
      %419 = vector.broadcast %cst_97 : f32 to vector<1x256xf32>
      %420 = arith.select %418, %417, %419 : vector<1x256xi1>, vector<1x256xf32>
      %421 = arith.addf %371, %420 : vector<1x256xf32>
      %c255_i32 = arith.constant 255 : i32
      %422 = tpu.dynamic_rotate %20 by %c255_i32 dim 1 : vector<1x256xf32>, i32 -> vector<1x256xf32>
      %c255_i32_98 = arith.constant 255 : i32
      %423 = tpu.dynamic_rotate %21 by %c255_i32_98 dim 1 : vector<1x256xf32>, i32 -> vector<1x256xf32>
      %c25 = arith.constant 25 : index
      %424 = memref.load %arg3[%c25] : memref<98xf32, #tpu.memory_space<smem>>
      %425 = vector.broadcast %424 : f32 to vector<1x256xf32>
      %426 = arith.mulf %425, %422 : vector<1x256xf32>
      %c74 = arith.constant 74 : index
      %427 = memref.load %arg3[%c74] : memref<98xf32, #tpu.memory_space<smem>>
      %428 = vector.broadcast %427 : f32 to vector<1x256xf32>
      %429 = arith.mulf %428, %423 : vector<1x256xf32>
      %430 = arith.addf %426, %429 : vector<1x256xf32>
      %431 = arith.andi %44, %84 : vector<1x256xi1>
      %cst_99 = arith.constant 0.000000e+00 : f32
      %432 = vector.broadcast %cst_99 : f32 to vector<1x256xf32>
      %433 = arith.select %431, %430, %432 : vector<1x256xi1>, vector<1x256xf32>
      %434 = arith.addf %384, %433 : vector<1x256xf32>
      %c254_i32 = arith.constant 254 : i32
      %435 = tpu.dynamic_rotate %20 by %c254_i32 dim 1 : vector<1x256xf32>, i32 -> vector<1x256xf32>
      %c254_i32_100 = arith.constant 254 : i32
      %436 = tpu.dynamic_rotate %21 by %c254_i32_100 dim 1 : vector<1x256xf32>, i32 -> vector<1x256xf32>
      %c26 = arith.constant 26 : index
      %437 = memref.load %arg3[%c26] : memref<98xf32, #tpu.memory_space<smem>>
      %438 = vector.broadcast %437 : f32 to vector<1x256xf32>
      %439 = arith.mulf %438, %435 : vector<1x256xf32>
      %c75 = arith.constant 75 : index
      %440 = memref.load %arg3[%c75] : memref<98xf32, #tpu.memory_space<smem>>
      %441 = vector.broadcast %440 : f32 to vector<1x256xf32>
      %442 = arith.mulf %441, %436 : vector<1x256xf32>
      %443 = arith.addf %439, %442 : vector<1x256xf32>
      %444 = arith.andi %44, %89 : vector<1x256xi1>
      %cst_101 = arith.constant 0.000000e+00 : f32
      %445 = vector.broadcast %cst_101 : f32 to vector<1x256xf32>
      %446 = arith.select %444, %443, %445 : vector<1x256xi1>, vector<1x256xf32>
      %447 = arith.addf %397, %446 : vector<1x256xf32>
      %c253_i32 = arith.constant 253 : i32
      %448 = tpu.dynamic_rotate %20 by %c253_i32 dim 1 : vector<1x256xf32>, i32 -> vector<1x256xf32>
      %c253_i32_102 = arith.constant 253 : i32
      %449 = tpu.dynamic_rotate %21 by %c253_i32_102 dim 1 : vector<1x256xf32>, i32 -> vector<1x256xf32>
      %c27 = arith.constant 27 : index
      %450 = memref.load %arg3[%c27] : memref<98xf32, #tpu.memory_space<smem>>
      %451 = vector.broadcast %450 : f32 to vector<1x256xf32>
      %452 = arith.mulf %451, %448 : vector<1x256xf32>
      %c76 = arith.constant 76 : index
      %453 = memref.load %arg3[%c76] : memref<98xf32, #tpu.memory_space<smem>>
      %454 = vector.broadcast %453 : f32 to vector<1x256xf32>
      %455 = arith.mulf %454, %449 : vector<1x256xf32>
      %456 = arith.addf %452, %455 : vector<1x256xf32>
      %457 = arith.andi %44, %94 : vector<1x256xi1>
      %cst_103 = arith.constant 0.000000e+00 : f32
      %458 = vector.broadcast %cst_103 : f32 to vector<1x256xf32>
      %459 = arith.select %457, %456, %458 : vector<1x256xi1>, vector<1x256xf32>
      %460 = arith.addf %410, %459 : vector<1x256xf32>
      %c243_i32 = arith.constant 243 : i32
      %461 = tpu.dynamic_rotate %20 by %c243_i32 dim 1 : vector<1x256xf32>, i32 -> vector<1x256xf32>
      %c243_i32_104 = arith.constant 243 : i32
      %462 = tpu.dynamic_rotate %21 by %c243_i32_104 dim 1 : vector<1x256xf32>, i32 -> vector<1x256xf32>
      %c28 = arith.constant 28 : index
      %463 = memref.load %arg3[%c28] : memref<98xf32, #tpu.memory_space<smem>>
      %464 = vector.broadcast %463 : f32 to vector<1x256xf32>
      %465 = arith.mulf %464, %461 : vector<1x256xf32>
      %c77 = arith.constant 77 : index
      %466 = memref.load %arg3[%c77] : memref<98xf32, #tpu.memory_space<smem>>
      %467 = vector.broadcast %466 : f32 to vector<1x256xf32>
      %468 = arith.mulf %467, %462 : vector<1x256xf32>
      %469 = arith.addf %465, %468 : vector<1x256xf32>
      %470 = arith.andi %49, %64 : vector<1x256xi1>
      %cst_105 = arith.constant 0.000000e+00 : f32
      %471 = vector.broadcast %cst_105 : f32 to vector<1x256xf32>
      %472 = arith.select %470, %469, %471 : vector<1x256xi1>, vector<1x256xf32>
      %473 = arith.addf %421, %472 : vector<1x256xf32>
      %c242_i32 = arith.constant 242 : i32
      %474 = tpu.dynamic_rotate %20 by %c242_i32 dim 1 : vector<1x256xf32>, i32 -> vector<1x256xf32>
      %c242_i32_106 = arith.constant 242 : i32
      %475 = tpu.dynamic_rotate %21 by %c242_i32_106 dim 1 : vector<1x256xf32>, i32 -> vector<1x256xf32>
      %c29 = arith.constant 29 : index
      %476 = memref.load %arg3[%c29] : memref<98xf32, #tpu.memory_space<smem>>
      %477 = vector.broadcast %476 : f32 to vector<1x256xf32>
      %478 = arith.mulf %477, %474 : vector<1x256xf32>
      %c78 = arith.constant 78 : index
      %479 = memref.load %arg3[%c78] : memref<98xf32, #tpu.memory_space<smem>>
      %480 = vector.broadcast %479 : f32 to vector<1x256xf32>
      %481 = arith.mulf %480, %475 : vector<1x256xf32>
      %482 = arith.addf %478, %481 : vector<1x256xf32>
      %483 = arith.andi %49, %69 : vector<1x256xi1>
      %cst_107 = arith.constant 0.000000e+00 : f32
      %484 = vector.broadcast %cst_107 : f32 to vector<1x256xf32>
      %485 = arith.select %483, %482, %484 : vector<1x256xi1>, vector<1x256xf32>
      %486 = arith.addf %434, %485 : vector<1x256xf32>
      %c241_i32 = arith.constant 241 : i32
      %487 = tpu.dynamic_rotate %20 by %c241_i32 dim 1 : vector<1x256xf32>, i32 -> vector<1x256xf32>
      %c241_i32_108 = arith.constant 241 : i32
      %488 = tpu.dynamic_rotate %21 by %c241_i32_108 dim 1 : vector<1x256xf32>, i32 -> vector<1x256xf32>
      %c30 = arith.constant 30 : index
      %489 = memref.load %arg3[%c30] : memref<98xf32, #tpu.memory_space<smem>>
      %490 = vector.broadcast %489 : f32 to vector<1x256xf32>
      %491 = arith.mulf %490, %487 : vector<1x256xf32>
      %c79 = arith.constant 79 : index
      %492 = memref.load %arg3[%c79] : memref<98xf32, #tpu.memory_space<smem>>
      %493 = vector.broadcast %492 : f32 to vector<1x256xf32>
      %494 = arith.mulf %493, %488 : vector<1x256xf32>
      %495 = arith.addf %491, %494 : vector<1x256xf32>
      %496 = arith.andi %49, %74 : vector<1x256xi1>
      %cst_109 = arith.constant 0.000000e+00 : f32
      %497 = vector.broadcast %cst_109 : f32 to vector<1x256xf32>
      %498 = arith.select %496, %495, %497 : vector<1x256xi1>, vector<1x256xf32>
      %499 = arith.addf %447, %498 : vector<1x256xf32>
      %c240_i32_110 = arith.constant 240 : i32
      %500 = tpu.dynamic_rotate %20 by %c240_i32_110 dim 1 : vector<1x256xf32>, i32 -> vector<1x256xf32>
      %c240_i32_111 = arith.constant 240 : i32
      %501 = tpu.dynamic_rotate %21 by %c240_i32_111 dim 1 : vector<1x256xf32>, i32 -> vector<1x256xf32>
      %c31 = arith.constant 31 : index
      %502 = memref.load %arg3[%c31] : memref<98xf32, #tpu.memory_space<smem>>
      %503 = vector.broadcast %502 : f32 to vector<1x256xf32>
      %504 = arith.mulf %503, %500 : vector<1x256xf32>
      %c80 = arith.constant 80 : index
      %505 = memref.load %arg3[%c80] : memref<98xf32, #tpu.memory_space<smem>>
      %506 = vector.broadcast %505 : f32 to vector<1x256xf32>
      %507 = arith.mulf %506, %501 : vector<1x256xf32>
      %508 = arith.addf %504, %507 : vector<1x256xf32>
      %509 = arith.andi %49, %79 : vector<1x256xi1>
      %cst_112 = arith.constant 0.000000e+00 : f32
      %510 = vector.broadcast %cst_112 : f32 to vector<1x256xf32>
      %511 = arith.select %509, %508, %510 : vector<1x256xi1>, vector<1x256xf32>
      %512 = arith.addf %460, %511 : vector<1x256xf32>
      %c239_i32 = arith.constant 239 : i32
      %513 = tpu.dynamic_rotate %20 by %c239_i32 dim 1 : vector<1x256xf32>, i32 -> vector<1x256xf32>
      %c239_i32_113 = arith.constant 239 : i32
      %514 = tpu.dynamic_rotate %21 by %c239_i32_113 dim 1 : vector<1x256xf32>, i32 -> vector<1x256xf32>
      %c32 = arith.constant 32 : index
      %515 = memref.load %arg3[%c32] : memref<98xf32, #tpu.memory_space<smem>>
      %516 = vector.broadcast %515 : f32 to vector<1x256xf32>
      %517 = arith.mulf %516, %513 : vector<1x256xf32>
      %c81 = arith.constant 81 : index
      %518 = memref.load %arg3[%c81] : memref<98xf32, #tpu.memory_space<smem>>
      %519 = vector.broadcast %518 : f32 to vector<1x256xf32>
      %520 = arith.mulf %519, %514 : vector<1x256xf32>
      %521 = arith.addf %517, %520 : vector<1x256xf32>
      %522 = arith.andi %49, %84 : vector<1x256xi1>
      %cst_114 = arith.constant 0.000000e+00 : f32
      %523 = vector.broadcast %cst_114 : f32 to vector<1x256xf32>
      %524 = arith.select %522, %521, %523 : vector<1x256xi1>, vector<1x256xf32>
      %525 = arith.addf %473, %524 : vector<1x256xf32>
      %c238_i32 = arith.constant 238 : i32
      %526 = tpu.dynamic_rotate %20 by %c238_i32 dim 1 : vector<1x256xf32>, i32 -> vector<1x256xf32>
      %c238_i32_115 = arith.constant 238 : i32
      %527 = tpu.dynamic_rotate %21 by %c238_i32_115 dim 1 : vector<1x256xf32>, i32 -> vector<1x256xf32>
      %c33 = arith.constant 33 : index
      %528 = memref.load %arg3[%c33] : memref<98xf32, #tpu.memory_space<smem>>
      %529 = vector.broadcast %528 : f32 to vector<1x256xf32>
      %530 = arith.mulf %529, %526 : vector<1x256xf32>
      %c82 = arith.constant 82 : index
      %531 = memref.load %arg3[%c82] : memref<98xf32, #tpu.memory_space<smem>>
      %532 = vector.broadcast %531 : f32 to vector<1x256xf32>
      %533 = arith.mulf %532, %527 : vector<1x256xf32>
      %534 = arith.addf %530, %533 : vector<1x256xf32>
      %535 = arith.andi %49, %89 : vector<1x256xi1>
      %cst_116 = arith.constant 0.000000e+00 : f32
      %536 = vector.broadcast %cst_116 : f32 to vector<1x256xf32>
      %537 = arith.select %535, %534, %536 : vector<1x256xi1>, vector<1x256xf32>
      %538 = arith.addf %486, %537 : vector<1x256xf32>
      %c237_i32 = arith.constant 237 : i32
      %539 = tpu.dynamic_rotate %20 by %c237_i32 dim 1 : vector<1x256xf32>, i32 -> vector<1x256xf32>
      %c237_i32_117 = arith.constant 237 : i32
      %540 = tpu.dynamic_rotate %21 by %c237_i32_117 dim 1 : vector<1x256xf32>, i32 -> vector<1x256xf32>
      %c34 = arith.constant 34 : index
      %541 = memref.load %arg3[%c34] : memref<98xf32, #tpu.memory_space<smem>>
      %542 = vector.broadcast %541 : f32 to vector<1x256xf32>
      %543 = arith.mulf %542, %539 : vector<1x256xf32>
      %c83 = arith.constant 83 : index
      %544 = memref.load %arg3[%c83] : memref<98xf32, #tpu.memory_space<smem>>
      %545 = vector.broadcast %544 : f32 to vector<1x256xf32>
      %546 = arith.mulf %545, %540 : vector<1x256xf32>
      %547 = arith.addf %543, %546 : vector<1x256xf32>
      %548 = arith.andi %49, %94 : vector<1x256xi1>
      %cst_118 = arith.constant 0.000000e+00 : f32
      %549 = vector.broadcast %cst_118 : f32 to vector<1x256xf32>
      %550 = arith.select %548, %547, %549 : vector<1x256xi1>, vector<1x256xf32>
      %551 = arith.addf %499, %550 : vector<1x256xf32>
      %c227_i32 = arith.constant 227 : i32
      %552 = tpu.dynamic_rotate %20 by %c227_i32 dim 1 : vector<1x256xf32>, i32 -> vector<1x256xf32>
      %c227_i32_119 = arith.constant 227 : i32
      %553 = tpu.dynamic_rotate %21 by %c227_i32_119 dim 1 : vector<1x256xf32>, i32 -> vector<1x256xf32>
      %c35 = arith.constant 35 : index
      %554 = memref.load %arg3[%c35] : memref<98xf32, #tpu.memory_space<smem>>
      %555 = vector.broadcast %554 : f32 to vector<1x256xf32>
      %556 = arith.mulf %555, %552 : vector<1x256xf32>
      %c84 = arith.constant 84 : index
      %557 = memref.load %arg3[%c84] : memref<98xf32, #tpu.memory_space<smem>>
      %558 = vector.broadcast %557 : f32 to vector<1x256xf32>
      %559 = arith.mulf %558, %553 : vector<1x256xf32>
      %560 = arith.addf %556, %559 : vector<1x256xf32>
      %561 = arith.andi %54, %64 : vector<1x256xi1>
      %cst_120 = arith.constant 0.000000e+00 : f32
      %562 = vector.broadcast %cst_120 : f32 to vector<1x256xf32>
      %563 = arith.select %561, %560, %562 : vector<1x256xi1>, vector<1x256xf32>
      %564 = arith.addf %512, %563 : vector<1x256xf32>
      %c226_i32 = arith.constant 226 : i32
      %565 = tpu.dynamic_rotate %20 by %c226_i32 dim 1 : vector<1x256xf32>, i32 -> vector<1x256xf32>
      %c226_i32_121 = arith.constant 226 : i32
      %566 = tpu.dynamic_rotate %21 by %c226_i32_121 dim 1 : vector<1x256xf32>, i32 -> vector<1x256xf32>
      %c36 = arith.constant 36 : index
      %567 = memref.load %arg3[%c36] : memref<98xf32, #tpu.memory_space<smem>>
      %568 = vector.broadcast %567 : f32 to vector<1x256xf32>
      %569 = arith.mulf %568, %565 : vector<1x256xf32>
      %c85 = arith.constant 85 : index
      %570 = memref.load %arg3[%c85] : memref<98xf32, #tpu.memory_space<smem>>
      %571 = vector.broadcast %570 : f32 to vector<1x256xf32>
      %572 = arith.mulf %571, %566 : vector<1x256xf32>
      %573 = arith.addf %569, %572 : vector<1x256xf32>
      %574 = arith.andi %54, %69 : vector<1x256xi1>
      %cst_122 = arith.constant 0.000000e+00 : f32
      %575 = vector.broadcast %cst_122 : f32 to vector<1x256xf32>
      %576 = arith.select %574, %573, %575 : vector<1x256xi1>, vector<1x256xf32>
      %577 = arith.addf %525, %576 : vector<1x256xf32>
      %c225_i32 = arith.constant 225 : i32
      %578 = tpu.dynamic_rotate %20 by %c225_i32 dim 1 : vector<1x256xf32>, i32 -> vector<1x256xf32>
      %c225_i32_123 = arith.constant 225 : i32
      %579 = tpu.dynamic_rotate %21 by %c225_i32_123 dim 1 : vector<1x256xf32>, i32 -> vector<1x256xf32>
      %c37 = arith.constant 37 : index
      %580 = memref.load %arg3[%c37] : memref<98xf32, #tpu.memory_space<smem>>
      %581 = vector.broadcast %580 : f32 to vector<1x256xf32>
      %582 = arith.mulf %581, %578 : vector<1x256xf32>
      %c86 = arith.constant 86 : index
      %583 = memref.load %arg3[%c86] : memref<98xf32, #tpu.memory_space<smem>>
      %584 = vector.broadcast %583 : f32 to vector<1x256xf32>
      %585 = arith.mulf %584, %579 : vector<1x256xf32>
      %586 = arith.addf %582, %585 : vector<1x256xf32>
      %587 = arith.andi %54, %74 : vector<1x256xi1>
      %cst_124 = arith.constant 0.000000e+00 : f32
      %588 = vector.broadcast %cst_124 : f32 to vector<1x256xf32>
      %589 = arith.select %587, %586, %588 : vector<1x256xi1>, vector<1x256xf32>
      %590 = arith.addf %538, %589 : vector<1x256xf32>
      %c224_i32_125 = arith.constant 224 : i32
      %591 = tpu.dynamic_rotate %20 by %c224_i32_125 dim 1 : vector<1x256xf32>, i32 -> vector<1x256xf32>
      %c224_i32_126 = arith.constant 224 : i32
      %592 = tpu.dynamic_rotate %21 by %c224_i32_126 dim 1 : vector<1x256xf32>, i32 -> vector<1x256xf32>
      %c38 = arith.constant 38 : index
      %593 = memref.load %arg3[%c38] : memref<98xf32, #tpu.memory_space<smem>>
      %594 = vector.broadcast %593 : f32 to vector<1x256xf32>
      %595 = arith.mulf %594, %591 : vector<1x256xf32>
      %c87 = arith.constant 87 : index
      %596 = memref.load %arg3[%c87] : memref<98xf32, #tpu.memory_space<smem>>
      %597 = vector.broadcast %596 : f32 to vector<1x256xf32>
      %598 = arith.mulf %597, %592 : vector<1x256xf32>
      %599 = arith.addf %595, %598 : vector<1x256xf32>
      %600 = arith.andi %54, %79 : vector<1x256xi1>
      %cst_127 = arith.constant 0.000000e+00 : f32
      %601 = vector.broadcast %cst_127 : f32 to vector<1x256xf32>
      %602 = arith.select %600, %599, %601 : vector<1x256xi1>, vector<1x256xf32>
      %603 = arith.addf %551, %602 : vector<1x256xf32>
      %c223_i32 = arith.constant 223 : i32
      %604 = tpu.dynamic_rotate %20 by %c223_i32 dim 1 : vector<1x256xf32>, i32 -> vector<1x256xf32>
      %c223_i32_128 = arith.constant 223 : i32
      %605 = tpu.dynamic_rotate %21 by %c223_i32_128 dim 1 : vector<1x256xf32>, i32 -> vector<1x256xf32>
      %c39 = arith.constant 39 : index
      %606 = memref.load %arg3[%c39] : memref<98xf32, #tpu.memory_space<smem>>
      %607 = vector.broadcast %606 : f32 to vector<1x256xf32>
      %608 = arith.mulf %607, %604 : vector<1x256xf32>
      %c88 = arith.constant 88 : index
      %609 = memref.load %arg3[%c88] : memref<98xf32, #tpu.memory_space<smem>>
      %610 = vector.broadcast %609 : f32 to vector<1x256xf32>
      %611 = arith.mulf %610, %605 : vector<1x256xf32>
      %612 = arith.addf %608, %611 : vector<1x256xf32>
      %613 = arith.andi %54, %84 : vector<1x256xi1>
      %cst_129 = arith.constant 0.000000e+00 : f32
      %614 = vector.broadcast %cst_129 : f32 to vector<1x256xf32>
      %615 = arith.select %613, %612, %614 : vector<1x256xi1>, vector<1x256xf32>
      %616 = arith.addf %564, %615 : vector<1x256xf32>
      %c222_i32 = arith.constant 222 : i32
      %617 = tpu.dynamic_rotate %20 by %c222_i32 dim 1 : vector<1x256xf32>, i32 -> vector<1x256xf32>
      %c222_i32_130 = arith.constant 222 : i32
      %618 = tpu.dynamic_rotate %21 by %c222_i32_130 dim 1 : vector<1x256xf32>, i32 -> vector<1x256xf32>
      %c40 = arith.constant 40 : index
      %619 = memref.load %arg3[%c40] : memref<98xf32, #tpu.memory_space<smem>>
      %620 = vector.broadcast %619 : f32 to vector<1x256xf32>
      %621 = arith.mulf %620, %617 : vector<1x256xf32>
      %c89 = arith.constant 89 : index
      %622 = memref.load %arg3[%c89] : memref<98xf32, #tpu.memory_space<smem>>
      %623 = vector.broadcast %622 : f32 to vector<1x256xf32>
      %624 = arith.mulf %623, %618 : vector<1x256xf32>
      %625 = arith.addf %621, %624 : vector<1x256xf32>
      %626 = arith.andi %54, %89 : vector<1x256xi1>
      %cst_131 = arith.constant 0.000000e+00 : f32
      %627 = vector.broadcast %cst_131 : f32 to vector<1x256xf32>
      %628 = arith.select %626, %625, %627 : vector<1x256xi1>, vector<1x256xf32>
      %629 = arith.addf %577, %628 : vector<1x256xf32>
      %c221_i32 = arith.constant 221 : i32
      %630 = tpu.dynamic_rotate %20 by %c221_i32 dim 1 : vector<1x256xf32>, i32 -> vector<1x256xf32>
      %c221_i32_132 = arith.constant 221 : i32
      %631 = tpu.dynamic_rotate %21 by %c221_i32_132 dim 1 : vector<1x256xf32>, i32 -> vector<1x256xf32>
      %c41 = arith.constant 41 : index
      %632 = memref.load %arg3[%c41] : memref<98xf32, #tpu.memory_space<smem>>
      %633 = vector.broadcast %632 : f32 to vector<1x256xf32>
      %634 = arith.mulf %633, %630 : vector<1x256xf32>
      %c90 = arith.constant 90 : index
      %635 = memref.load %arg3[%c90] : memref<98xf32, #tpu.memory_space<smem>>
      %636 = vector.broadcast %635 : f32 to vector<1x256xf32>
      %637 = arith.mulf %636, %631 : vector<1x256xf32>
      %638 = arith.addf %634, %637 : vector<1x256xf32>
      %639 = arith.andi %54, %94 : vector<1x256xi1>
      %cst_133 = arith.constant 0.000000e+00 : f32
      %640 = vector.broadcast %cst_133 : f32 to vector<1x256xf32>
      %641 = arith.select %639, %638, %640 : vector<1x256xi1>, vector<1x256xf32>
      %642 = arith.addf %590, %641 : vector<1x256xf32>
      %c211_i32 = arith.constant 211 : i32
      %643 = tpu.dynamic_rotate %20 by %c211_i32 dim 1 : vector<1x256xf32>, i32 -> vector<1x256xf32>
      %c211_i32_134 = arith.constant 211 : i32
      %644 = tpu.dynamic_rotate %21 by %c211_i32_134 dim 1 : vector<1x256xf32>, i32 -> vector<1x256xf32>
      %c42 = arith.constant 42 : index
      %645 = memref.load %arg3[%c42] : memref<98xf32, #tpu.memory_space<smem>>
      %646 = vector.broadcast %645 : f32 to vector<1x256xf32>
      %647 = arith.mulf %646, %643 : vector<1x256xf32>
      %c91 = arith.constant 91 : index
      %648 = memref.load %arg3[%c91] : memref<98xf32, #tpu.memory_space<smem>>
      %649 = vector.broadcast %648 : f32 to vector<1x256xf32>
      %650 = arith.mulf %649, %644 : vector<1x256xf32>
      %651 = arith.addf %647, %650 : vector<1x256xf32>
      %652 = arith.andi %59, %64 : vector<1x256xi1>
      %cst_135 = arith.constant 0.000000e+00 : f32
      %653 = vector.broadcast %cst_135 : f32 to vector<1x256xf32>
      %654 = arith.select %652, %651, %653 : vector<1x256xi1>, vector<1x256xf32>
      %655 = arith.addf %603, %654 : vector<1x256xf32>
      %c210_i32 = arith.constant 210 : i32
      %656 = tpu.dynamic_rotate %20 by %c210_i32 dim 1 : vector<1x256xf32>, i32 -> vector<1x256xf32>
      %c210_i32_136 = arith.constant 210 : i32
      %657 = tpu.dynamic_rotate %21 by %c210_i32_136 dim 1 : vector<1x256xf32>, i32 -> vector<1x256xf32>
      %c43 = arith.constant 43 : index
      %658 = memref.load %arg3[%c43] : memref<98xf32, #tpu.memory_space<smem>>
      %659 = vector.broadcast %658 : f32 to vector<1x256xf32>
      %660 = arith.mulf %659, %656 : vector<1x256xf32>
      %c92 = arith.constant 92 : index
      %661 = memref.load %arg3[%c92] : memref<98xf32, #tpu.memory_space<smem>>
      %662 = vector.broadcast %661 : f32 to vector<1x256xf32>
      %663 = arith.mulf %662, %657 : vector<1x256xf32>
      %664 = arith.addf %660, %663 : vector<1x256xf32>
      %665 = arith.andi %59, %69 : vector<1x256xi1>
      %cst_137 = arith.constant 0.000000e+00 : f32
      %666 = vector.broadcast %cst_137 : f32 to vector<1x256xf32>
      %667 = arith.select %665, %664, %666 : vector<1x256xi1>, vector<1x256xf32>
      %668 = arith.addf %616, %667 : vector<1x256xf32>
      %c209_i32 = arith.constant 209 : i32
      %669 = tpu.dynamic_rotate %20 by %c209_i32 dim 1 : vector<1x256xf32>, i32 -> vector<1x256xf32>
      %c209_i32_138 = arith.constant 209 : i32
      %670 = tpu.dynamic_rotate %21 by %c209_i32_138 dim 1 : vector<1x256xf32>, i32 -> vector<1x256xf32>
      %c44 = arith.constant 44 : index
      %671 = memref.load %arg3[%c44] : memref<98xf32, #tpu.memory_space<smem>>
      %672 = vector.broadcast %671 : f32 to vector<1x256xf32>
      %673 = arith.mulf %672, %669 : vector<1x256xf32>
      %c93 = arith.constant 93 : index
      %674 = memref.load %arg3[%c93] : memref<98xf32, #tpu.memory_space<smem>>
      %675 = vector.broadcast %674 : f32 to vector<1x256xf32>
      %676 = arith.mulf %675, %670 : vector<1x256xf32>
      %677 = arith.addf %673, %676 : vector<1x256xf32>
      %678 = arith.andi %59, %74 : vector<1x256xi1>
      %cst_139 = arith.constant 0.000000e+00 : f32
      %679 = vector.broadcast %cst_139 : f32 to vector<1x256xf32>
      %680 = arith.select %678, %677, %679 : vector<1x256xi1>, vector<1x256xf32>
      %681 = arith.addf %629, %680 : vector<1x256xf32>
      %c208_i32_140 = arith.constant 208 : i32
      %682 = tpu.dynamic_rotate %20 by %c208_i32_140 dim 1 : vector<1x256xf32>, i32 -> vector<1x256xf32>
      %c208_i32_141 = arith.constant 208 : i32
      %683 = tpu.dynamic_rotate %21 by %c208_i32_141 dim 1 : vector<1x256xf32>, i32 -> vector<1x256xf32>
      %c45 = arith.constant 45 : index
      %684 = memref.load %arg3[%c45] : memref<98xf32, #tpu.memory_space<smem>>
      %685 = vector.broadcast %684 : f32 to vector<1x256xf32>
      %686 = arith.mulf %685, %682 : vector<1x256xf32>
      %c94 = arith.constant 94 : index
      %687 = memref.load %arg3[%c94] : memref<98xf32, #tpu.memory_space<smem>>
      %688 = vector.broadcast %687 : f32 to vector<1x256xf32>
      %689 = arith.mulf %688, %683 : vector<1x256xf32>
      %690 = arith.addf %686, %689 : vector<1x256xf32>
      %691 = arith.andi %59, %79 : vector<1x256xi1>
      %cst_142 = arith.constant 0.000000e+00 : f32
      %692 = vector.broadcast %cst_142 : f32 to vector<1x256xf32>
      %693 = arith.select %691, %690, %692 : vector<1x256xi1>, vector<1x256xf32>
      %694 = arith.addf %642, %693 : vector<1x256xf32>
      %c207_i32 = arith.constant 207 : i32
      %695 = tpu.dynamic_rotate %20 by %c207_i32 dim 1 : vector<1x256xf32>, i32 -> vector<1x256xf32>
      %c207_i32_143 = arith.constant 207 : i32
      %696 = tpu.dynamic_rotate %21 by %c207_i32_143 dim 1 : vector<1x256xf32>, i32 -> vector<1x256xf32>
      %c46 = arith.constant 46 : index
      %697 = memref.load %arg3[%c46] : memref<98xf32, #tpu.memory_space<smem>>
      %698 = vector.broadcast %697 : f32 to vector<1x256xf32>
      %699 = arith.mulf %698, %695 : vector<1x256xf32>
      %c95 = arith.constant 95 : index
      %700 = memref.load %arg3[%c95] : memref<98xf32, #tpu.memory_space<smem>>
      %701 = vector.broadcast %700 : f32 to vector<1x256xf32>
      %702 = arith.mulf %701, %696 : vector<1x256xf32>
      %703 = arith.addf %699, %702 : vector<1x256xf32>
      %704 = arith.andi %59, %84 : vector<1x256xi1>
      %cst_144 = arith.constant 0.000000e+00 : f32
      %705 = vector.broadcast %cst_144 : f32 to vector<1x256xf32>
      %706 = arith.select %704, %703, %705 : vector<1x256xi1>, vector<1x256xf32>
      %707 = arith.addf %655, %706 : vector<1x256xf32>
      %c206_i32 = arith.constant 206 : i32
      %708 = tpu.dynamic_rotate %20 by %c206_i32 dim 1 : vector<1x256xf32>, i32 -> vector<1x256xf32>
      %c206_i32_145 = arith.constant 206 : i32
      %709 = tpu.dynamic_rotate %21 by %c206_i32_145 dim 1 : vector<1x256xf32>, i32 -> vector<1x256xf32>
      %c47 = arith.constant 47 : index
      %710 = memref.load %arg3[%c47] : memref<98xf32, #tpu.memory_space<smem>>
      %711 = vector.broadcast %710 : f32 to vector<1x256xf32>
      %712 = arith.mulf %711, %708 : vector<1x256xf32>
      %c96 = arith.constant 96 : index
      %713 = memref.load %arg3[%c96] : memref<98xf32, #tpu.memory_space<smem>>
      %714 = vector.broadcast %713 : f32 to vector<1x256xf32>
      %715 = arith.mulf %714, %709 : vector<1x256xf32>
      %716 = arith.addf %712, %715 : vector<1x256xf32>
      %717 = arith.andi %59, %89 : vector<1x256xi1>
      %cst_146 = arith.constant 0.000000e+00 : f32
      %718 = vector.broadcast %cst_146 : f32 to vector<1x256xf32>
      %719 = arith.select %717, %716, %718 : vector<1x256xi1>, vector<1x256xf32>
      %720 = arith.addf %668, %719 : vector<1x256xf32>
      %c205_i32 = arith.constant 205 : i32
      %721 = tpu.dynamic_rotate %20 by %c205_i32 dim 1 : vector<1x256xf32>, i32 -> vector<1x256xf32>
      %c205_i32_147 = arith.constant 205 : i32
      %722 = tpu.dynamic_rotate %21 by %c205_i32_147 dim 1 : vector<1x256xf32>, i32 -> vector<1x256xf32>
      %c48 = arith.constant 48 : index
      %723 = memref.load %arg3[%c48] : memref<98xf32, #tpu.memory_space<smem>>
      %724 = vector.broadcast %723 : f32 to vector<1x256xf32>
      %725 = arith.mulf %724, %721 : vector<1x256xf32>
      %c97 = arith.constant 97 : index
      %726 = memref.load %arg3[%c97] : memref<98xf32, #tpu.memory_space<smem>>
      %727 = vector.broadcast %726 : f32 to vector<1x256xf32>
      %728 = arith.mulf %727, %722 : vector<1x256xf32>
      %729 = arith.addf %725, %728 : vector<1x256xf32>
      %730 = arith.andi %59, %94 : vector<1x256xi1>
      %cst_148 = arith.constant 0.000000e+00 : f32
      %731 = vector.broadcast %cst_148 : f32 to vector<1x256xf32>
      %732 = arith.select %730, %729, %731 : vector<1x256xi1>, vector<1x256xf32>
      %733 = arith.addf %681, %732 : vector<1x256xf32>
      %734 = arith.addf %733, %694 : vector<1x256xf32>
      %735 = arith.addf %707, %720 : vector<1x256xf32>
      %736 = arith.addf %734, %735 : vector<1x256xf32>
      %737 = arith.negf %736 : vector<1x256xf32>
      %738 = math.exp %737 : vector<1x256xf32>
      %cst_149 = arith.constant 1.000000e+00 : f32
      %739 = vector.broadcast %cst_149 : f32 to vector<1x256xf32>
      %740 = arith.addf %739, %738 : vector<1x256xf32>
      %741 = arith.divf %739, %740 : vector<1x256xf32>
      %c0_150 = arith.constant 0 : index
      %c0_151 = arith.constant 0 : index
      %c0_152 = arith.constant 0 : index
      %742 = vector.load %arg4[%c0_150, %c0_151, %c0_152] : memref<1x1x256xf32, #tpu.memory_space<vmem>>, vector<1x1x256xf32>
      %743 = vector.shape_cast %742 : vector<1x1x256xf32> to vector<1x256xf32>
      %744 = vector.shape_cast %741 : vector<1x256xf32> to vector<1x1x256xf32>
      tpu.vector_store %arg4[%c0_150, %c0_151, %c0_152], %744 {strides = array<i32>} : memref<1x1x256xf32, #tpu.memory_space<vmem>>, vector<1x1x256xf32>,
    } else {
    }
    return
  }
  func.func @transform_0(%arg0: i32, %arg1: i32) -> (i32, i32, i32) {
    %c0_i32 = arith.constant 0 : i32
    %c0_i32_0 = arith.constant 0 : i32
    return %arg0, %arg1, %c0_i32 : i32, i32, i32
  }
  func.func @transform_1(%arg0: i32, %arg1: i32) -> i32 {
    %c0_i32 = arith.constant 0 : i32
    %c0_i32_0 = arith.constant 0 : i32
    return %c0_i32 : i32
  }
  func.func @transform_2(%arg0: i32, %arg1: i32) -> (i32, i32, i32) {
    %c0_i32 = arith.constant 0 : i32
    %c0_i32_0 = arith.constant 0 : i32
    %c0_i32_1 = arith.constant 0 : i32
    return %arg0, %c0_i32, %c0_i32_0 : i32, i32, i32
  }
}

</mosaic_0001>

<llo_original>
// kernel: tpu_custom_call.1
$region0: #{tpu_custom_call.1}
  #allocation0 [shape = 'u32[]', space=smem, size = 0x4, offset = 0x4, fixed_abs, tag = 'smem constant byte address 0x4 - core index']
  #allocation1 [shape = 'u32[144,128]{1,0:T(1,128)}', space=vmem, size = 0x12000, scoped, tag = 'internal scratch']
  #allocation2 [shape = 'f32[1,256]{1,0:T(1,128)}', space=vmem, size = 0x400, scoped, tag = 'scratch operand']
  #allocation3 [shape = 'f32[1,256]{1,0:T(1,128)}', space=vmem, size = 0x400, scoped, tag = 'scratch operand']
  %s0 = inlined_call_operand.hbm [shape: f32[2,4,256], index: 0, kind: input, shape index: {}]
  %s1 = inlined_call_operand.vmem [shape: f32[98], index: 1, kind: input, shape index: {}]
  %s2 = inlined_call_operand.hbm [shape: f32[2,1,256], index: 2, kind: output, shape index: {}]
  %s3 = sld [smem:[#allocation0]]
  $region57: #{tpu_custom_call.1} parent=0
    _
  %s5 = ssub.s32 1, %s3
  %s6 = scalar_select 0, %s5, %s3
  $region1: #{tpu_custom_call.1} parent=0
    #allocation4 [shape = 'u8[8192]{0}', space=vmem, size = 0x2000, scoped, tag = 'input window, operand 0']
    #allocation5 [shape = 's32[2]{0}', space=sflag, size = 0x8, scoped, tag = 'scoped memory for tpu_custom_call.1']
    #allocation6 [shape = 's32[2]{0}', space=sflag, size = 0x8, scoped, tag = 'scoped memory for tpu_custom_call.1']
    #allocation7 [shape = 's32[2]{0}', space=sflag, size = 0x8, scoped, tag = 'scoped memory for tpu_custom_call.1']
    #allocation8 [shape = 'u8[512]{0}', space=smem, size = 0x200, scoped, tag = 'input window, operand 1, single buffered']
    #allocation9 [shape = 'u8[2048]{0}', space=vmem, size = 0x800, scoped, tag = 'output window, operand 0']
    %7 = vsyncpa [#allocation5], 0
    %s8 = scalar_lea.sflag [#allocation5], 1
    %9 = vsyncpa %s8, 0
    %10 = vsyncpa [#allocation7], 0
    %11 = vsyncpa [#allocation6], 0
    %s12 = scalar_lea.sflag [#allocation6], 1
    %13 = vsyncpa %s12, 0
    loop: start=0, step=1, limit=4
    $region2: #{tpu_custom_call.1} parent=1 // loop_pre_header
      _
    $region3: #{tpu_custom_call.1} parent=1 // loop_header
      %s15 = sphi 0, %s19
      %p16 = scmp.ge.s32.totalorder %s15, 4
      %s22 = sphi 0, %s34
      %s23 = sphi 0, %s30
      %s24 = sphi 0, %s22
      %s25 = sphi 0, %s23
      %s26 = sphi 0, %s24
      %s27 = sphi 0, %s25
      %s39 = sphi 0, %s41
      %s42 = sphi 0, %s39
      %s43 = sphi 0, %s42
      %s59 = sphi 0, %s43
      %s63 = sphi 0, %s63
      %s65 = sphi 0, %s63
      %s66 = sphi 0, %s65
      %s80 = sphi 0, %s66
      %s86 = sphi 0, %s88
      %s89 = sphi 0, %s86
      %s90 = sphi 0, %s89
      %s106 = sphi 0, %s90
    $region4: #{tpu_custom_call.1} parent=1 // loop_header_branch
      %18 = sbr.rel (%p16) target = $region8
    $region5: #{tpu_custom_call.1} parent=1 // loop_body
      %s20 = ssub.s32 %s15, 1
      %s21 = ssub.s32 %s15, 2
      %s28 = sadd.s32 1, %s23
      %p29 = scmp.ge.s32.totalorder %s28, 1
      %s30 = scalar_select %p29, 0, %s28
      %s31 = sadd.s32 1, %s22
      %s32 = scalar_select %p29, %s31, %s22
      %p33 = scmp.ge.s32.totalorder %s32, 2
      %s34 = scalar_select %p33, 0, %s32
      %s35 = ssub.s32 %s22, %s34
      %s36 = ssub.s32 %s23, %s30
      %s37 = sor.u32 %s35, %s36
      %p38 = scmp.eq.s32.totalorder %s37, 0
      %s40 = sadd.s32 %s39, 1
      %s41 = scalar_select %p38, %s39, %s40
      %p44 = pneg %p38
      %p45 = scmp.eq.s32.totalorder %s15, 1
      %p46 = por %p44, %p45
      %p47 = scmp.ne.s32.totalorder %s39, %s42
      %p48 = scmp.eq.s32.totalorder %s15, 0
      %p49 = por %p47, %p48
      %p50 = scmp.ne.s32.totalorder %s39, %s42
      %p51 = scmp.eq.s32.totalorder %s20, 1
      %p52 = por %p50, %p51
      %p53 = scmp.ne.s32.totalorder %s42, %s43
      %p54 = scmp.eq.s32.totalorder %s20, 0
      %p55 = por %p53, %p54
      %p56 = scmp.ne.s32.totalorder %s42, %s43
      %p57 = scmp.eq.s32.totalorder %s21, 1
      %p58 = por %p56, %p57
      %p60 = scmp.ne.s32.totalorder %s43, %s59
      %p61 = scmp.eq.s32.totalorder %s21, 0
      %p62 = por %p60, %p61
      %s64 = sadd.s32 %s63, 1
      %p67 = scmp.eq.s32.totalorder %s15, 1
      %p68 = scmp.ne.s32.totalorder %s63, %s65
      %p69 = scmp.eq.s32.totalorder %s15, 0
      %p70 = por %p68, %p69
      %p71 = scmp.ne.s32.totalorder %s63, %s65
      %p72 = scmp.eq.s32.totalorder %s20, 1
      %p73 = por %p71, %p72
      %p74 = scmp.ne.s32.totalorder %s65, %s66
      %p75 = scmp.eq.s32.totalorder %s20, 0
      %p76 = por %p74, %p75
      %p77 = scmp.ne.s32.totalorder %s65, %s66
      %p78 = scmp.eq.s32.totalorder %s21, 1
      %p79 = por %p77, %p78
      %p81 = scmp.ne.s32.totalorder %s66, %s80
      %p82 = scmp.eq.s32.totalorder %s21, 0
      %p83 = por %p81, %p82
      %s84 = ssub.s32 %s22, %s34
      %p85 = scmp.eq.s32.totalorder %s84, 0
      %s87 = sadd.s32 %s86, 1
      %s88 = scalar_select %p85, %s86, %s87
      %p91 = pneg %p85
      %p92 = scmp.eq.s32.totalorder %s15, 1
      %p93 = por %p91, %p92
      %p94 = scmp.ne.s32.totalorder %s86, %s89
      %p95 = scmp.eq.s32.totalorder %s15, 0
      %p96 = por %p94, %p95
      %p97 = scmp.ne.s32.totalorder %s86, %s89
      %p98 = scmp.eq.s32.totalorder %s20, 1
      %p99 = por %p97, %p98
      %p100 = scmp.ne.s32.totalorder %s89, %s90
      %p101 = scmp.eq.s32.totalorder %s20, 0
      %p102 = por %p100, %p101
      %p103 = scmp.ne.s32.totalorder %s89, %s90
      %p104 = scmp.eq.s32.totalorder %s21, 1
      %p105 = por %p103, %p104
      %p107 = scmp.ne.s32.totalorder %s90, %s106
      %p108 = scmp.eq.s32.totalorder %s21, 0
      %p109 = por %p107, %p108
      %p110 = scmp.le.s32.totalorder 1, %s15
      %p111 = scmp.lt.s32.totalorder %s15, 3
      %p112 = pnand %p110, %p111
      %p113 = pneg %p112
      // Predicated region
      $region9: #{tpu_custom_call.1} parent=5 // pred_check
        _
      $region10: #{tpu_custom_call.1} parent=5 // pred_check_branch
        %115 = sbr.rel (%p112) target = $region12
      $region11: #{tpu_custom_call.1} parent=5 // pred_region
        %s116 = ssub.s32 %s15, 1
        // Predicated region
        $region13: #{tpu_custom_call.1} parent=11 // pred_check
          %p117 = pneg %p76
        $region14: #{tpu_custom_call.1} parent=11 // pred_check_branch
          %119 = sbr.rel (%p117) target = $region16
        $region15: #{tpu_custom_call.1} parent=11 // pred_region
          %s121 = ssub.s32 16, 16
          %122 = vsyncadd [#allocation7], %s121
          %s124 = sshll.u32 %s1, 4
          %s125 = int_to_ptr.vmem [resolvable:$true] %s124
          %127 = dma.vmem_to_smem %s125, 16, [#allocation8], [#allocation7]
        $region16: #{tpu_custom_call.1} parent=11 // pred_fallthru
          _
      $region12: #{tpu_custom_call.1} parent=5 // pred_fallthru
        _
      %p128 = scmp.lt.s32.totalorder %s15, 2
      // Predicated region
      $region17: #{tpu_custom_call.1} parent=5 // pred_check
        %p129 = pneg %p128
      $region18: #{tpu_custom_call.1} parent=5 // pred_check_branch
        %131 = sbr.rel (%p129) target = $region20
      $region19: #{tpu_custom_call.1} parent=5 // pred_region
        // Predicated region
        $region21: #{tpu_custom_call.1} parent=19 // pred_check
          %p132 = pneg %p49
        $region22: #{tpu_custom_call.1} parent=19 // pred_check_branch
          %134 = sbr.rel (%p132) target = $region24
        $region23: #{tpu_custom_call.1} parent=19 // pred_region
          %s135 = sand.u32 %s39, 1
          %s136 = scalar_lea.sflag [#allocation5], %s135
          %s137 = sand.u32 %s39, 1
          %s138 = smul.addr %s137, 8
          %s139 = scalar_lea.vmem [#allocation4], %s138
          %s141 = ssub.s32 128, 128
          %142 = vsyncadd %s136, %s141
          %s143 = smul.addr %s23, 2
          %s144 = smul.addr %s22, 2
          %s145 = sadd.s32 %s143, %s144
          %s146 = smul.addr %s145, 64
          %s147 = scalar_lea.hbm %s0, %s146
          %s149 = sshll.u32 %s139, 4
          %s150 = int_to_ptr.vmem [resolvable:$true] %s149
          %152 = dma.hbm_to_vmem [thread:$0]  %s147, 128, %s150, %s136
        $region24: #{tpu_custom_call.1} parent=19 // pred_fallthru
          _
      $region20: #{tpu_custom_call.1} parent=5 // pred_fallthru
        _
      %p153 = scmp.le.s32.totalorder 1, %s15
      %p154 = scmp.lt.s32.totalorder %s15, 3
      %p155 = pnand %p153, %p154
      %p156 = pneg %p155
      // Predicated region
      $region25: #{tpu_custom_call.1} parent=5 // pred_check
        _
      $region26: #{tpu_custom_call.1} parent=5 // pred_check_branch
        %158 = sbr.rel (%p155) target = $region28
      $region27: #{tpu_custom_call.1} parent=5 // pred_region
        %s159 = ssub.s32 %s15, 1
        %s160 = sand.u32 %s42, 1
        %s161 = scalar_lea.sflag [#allocation5], %s160
        %s162 = sand.u32 %s42, 1
        %s163 = smul.addr %s162, 8
        %s164 = scalar_lea.vmem [#allocation4], %s163
        // Predicated region
        $region29: #{tpu_custom_call.1} parent=27 // pred_check
          %p165 = pneg %p55
        $region30: #{tpu_custom_call.1} parent=27 // pred_check_branch
          %167 = sbr.rel (%p165) target = $region32
        $region31: #{tpu_custom_call.1} parent=27 // pred_region
          %168 = dma.done %s161, 128
        $region32: #{tpu_custom_call.1} parent=27 // pred_fallthru
          _
        // Predicated region
        $region33: #{tpu_custom_call.1} parent=27 // pred_check
          %p169 = pneg %p76
        $region34: #{tpu_custom_call.1} parent=27 // pred_check_branch
          %171 = sbr.rel (%p169) target = $region36
        $region35: #{tpu_custom_call.1} parent=27 // pred_region
          %172 = dma.done [#allocation7], 16
        $region36: #{tpu_custom_call.1} parent=27 // pred_fallthru
          _
        %173 = sfence
        %s174 = sand.u32 %s42, 1
        %s175 = scalar_lea.sflag [#allocation5], %s174
        %s176 = sand.u32 %s42, 1
        %s177 = smul.addr %s176, 8
        %s178 = scalar_lea.vmem [#allocation4], %s177
        %p179 = pneg %p55
        %p180 = pneg %p52
        %p181 = pneg %p76
        %p182 = pneg %p73
        %p183 = pneg %p102
        %p184 = pneg %p99
        %s185 = sand.u32 %s89, 1
        %s186 = scalar_lea.sflag [#allocation6], %s185
        %s187 = sand.u32 %s89, 1
        %s188 = smul.addr %s187, 2
        %s189 = scalar_lea.vmem [#allocation9], %s188
        %p190 = scmp.eq.s32.totalorder %s25, 0
        // Predicated region
        $region37: #{tpu_custom_call.1} parent=27 // pred_check
          %p191 = pneg %p190
        $region38: #{tpu_custom_call.1} parent=27 // pred_check_branch
          %193 = sbr.rel (%p191) target = $region40
        $region39: #{tpu_custom_call.1} parent=27 // pred_region
          %v194 = vlaneseq
          %vm195 = vcmp.ge.s32.totalorder %v194, 0
          %vm196 = vcmp.lt.s32.totalorder %v194, 256
          %vm197 = vmand %vm195, %vm196
          %198 = vst.msk [vmem:[#allocation2] sm:$0x3] %vm197, 0.0
          %199 = vst.msk [vmem:[#allocation3] sm:$0x3] %vm197, -inf
        $region40: #{tpu_custom_call.1} parent=27 // pred_fallthru
          _
        %v200 = vld [vmem:[%s164] sm:$0xff]
        %v201 = vld [vmem:[#allocation2] sm:$0x3]
        %v203 = vcombine.high %v200, %v200
        %vm205 = vcmask 1043456
        %v206 = vsel %vm205, %v200, 0.0
        %v207 = vrot.slane %v206, 4
        %v208 = vadd.f32 %v206, %v207
        %v209 = vrot.slane %v208, 2
        %v210 = vadd.f32 %v208, %v209
        %v211 = vrot.slane %v210, 1
        %v212 = vadd.f32 %v210, %v211
        %v213 = vsel %vm205, %v203, 0.0
        %v214 = vrot.slane %v213, 4
        %v215 = vadd.f32 %v213, %v214
        %v216 = vrot.slane %v215, 2
        %v217 = vadd.f32 %v215, %v216
        %v218 = vrot.slane %v217, 1
        %v219 = vadd.f32 %v217, %v218
        %v222 = vcombine.low %v212, %v219
        %v224 = vunpack.c.l.s4 1966171168
        %v225 = vunpack.c.0.s8 %v224
        %v226 = vlaneseq
        %v227 = vshrl.u32 %v226, 7
        %v228 = vsub.s32 %v225, %v227
        %v229 = vrot.slane %v222, %v228
        %v231 = vunpack.c.l.s4 1966171168
        %v232 = vunpack.c.0.s8 %v231
        %v233 = vlaneseq
        %v234 = vshrl.u32 %v233, 7
        %v235 = vsub.s32 %v232, %v234
        %v236 = vrot.slane %v229, %v235
        %v238 = vadd.f32 %v201, %v236
        %v239 = vlaneseq
        %vm240 = vcmp.ge.s32.totalorder %v239, 0
        %vm241 = vcmp.lt.s32.totalorder %v239, 256
        %vm242 = vmand %vm240, %vm241
        %243 = vst.msk [vmem:[#allocation2] sm:$0x3] %vm242, %v238
        %v244 = vld [vmem:[#allocation3] sm:$0x3]
        %v245 = vsel %vm205, %v200, -inf
        %v246 = vrot.slane %v245, 4
        %v247 = vmax.f32 %v245, %v246
        %v248 = vrot.slane %v247, 2
        %v249 = vmax.f32 %v247, %v248
        %v250 = vrot.slane %v249, 1
        %v251 = vmax.f32 %v249, %v250
        %v252 = vsel %vm205, %v203, -inf
        %v253 = vrot.slane %v252, 4
        %v254 = vmax.f32 %v252, %v253
        %v255 = vrot.slane %v254, 2
        %v256 = vmax.f32 %v254, %v255
        %v257 = vrot.slane %v256, 1
        %v258 = vmax.f32 %v256, %v257
        %v261 = vcombine.low %v251, %v258
        %v263 = vunpack.c.l.s4 1966171168
        %v264 = vunpack.c.0.s8 %v263
        %v265 = vlaneseq
        %v266 = vshrl.u32 %v265, 7
        %v267 = vsub.s32 %v264, %v266
        %v268 = vrot.slane %v261, %v267
        %v270 = vunpack.c.l.s4 1966171168
        %v271 = vunpack.c.0.s8 %v270
        %v272 = vlaneseq
        %v273 = vshrl.u32 %v272, 7
        %v274 = vsub.s32 %v271, %v273
        %v275 = vrot.slane %v268, %v274
        %v277 = vmax.f32 %v244, %v275
        %278 = vst.msk [vmem:[#allocation3] sm:$0x3] %vm242, %v277
        // Predicated region
        $region41: #{tpu_custom_call.1} parent=27 // pred_check
          %p279 = pneg %p190
        $region42: #{tpu_custom_call.1} parent=27 // pred_check_branch
          %281 = sbr.rel (%p279) target = $region44
        $region43: #{tpu_custom_call.1} parent=27 // pred_region
          %v282 = vld [vmem:[#allocation2] sm:$0x3]
          %v283 = vmul.f32 %v282, 0.25
          %v284 = vld [vmem:[#allocation3] sm:$0x3]
          %v285 = vlaneseq
          %v286 = vand.u32 %v285, 127
          %v287 = vadd.s32 %v286, 128
          %v288 = vand.u32 %v286, 15
          %v289 = vand.u32 %v287, 15
          %vm290 = vcmp.ge.s32.totalorder %v286, 48
          %vm291 = vcmp.ge.s32.totalorder %v287, 48
          %vm292 = vcmp.lt.s32.totalorder %v286, 256
          %vm293 = vcmp.lt.s32.totalorder %v287, 256
          %vm294 = vmand %vm290, %vm292
          %vm295 = vmand %vm291, %vm293
          %vm296 = vcmp.ge.s32.totalorder %v286, 32
          %vm297 = vcmp.ge.s32.totalorder %v287, 32
          %vm298 = vmand %vm296, %vm292
          %vm299 = vmand %vm297, %vm293
          %vm300 = vcmp.ge.s32.totalorder %v286, 16
          %vm301 = vcmp.ge.s32.totalorder %v287, 16
          %vm302 = vmand %vm300, %vm292
          %vm303 = vmand %vm301, %vm293
          %vm304 = vcmp.ge.s32.totalorder %v286, 0
          %vm305 = vcmp.ge.s32.totalorder %v287, 0
          %vm306 = vmand %vm304, %vm292
          %vm307 = vmand %vm305, %vm293
          %vm308 = vcmp.lt.s32.totalorder %v286, 240
          %vm309 = vcmp.lt.s32.totalorder %v287, 240
          %vm310 = vmand %vm304, %vm308
          %vm311 = vmand %vm305, %vm309
          %vm312 = vcmp.lt.s32.totalorder %v286, 224
          %vm313 = vcmp.lt.s32.totalorder %v287, 224
          %vm314 = vmand %vm304, %vm312
          %vm315 = vmand %vm305, %vm313
          %vm316 = vcmp.lt.s32.totalorder %v286, 208
          %vm317 = vcmp.lt.s32.totalorder %v287, 208
          %vm318 = vmand %vm304, %vm316
          %vm319 = vmand %vm305, %vm317
          %vm320 = vcmp.ge.s32.totalorder %v288, 3
          %vm321 = vcmp.ge.s32.totalorder %v289, 3
          %vm322 = vcmp.lt.s32.totalorder %v288, 16
          %vm323 = vcmp.lt.s32.totalorder %v289, 16
          %vm324 = vmand %vm320, %vm322
          %vm325 = vmand %vm321, %vm323
          %vm326 = vcmp.ge.s32.totalorder %v288, 2
          %vm327 = vcmp.ge.s32.totalorder %v289, 2
          %vm328 = vmand %vm326, %vm322
          %vm329 = vmand %vm327, %vm323
          %vm330 = vcmp.ge.s32.totalorder %v288, 1
          %vm331 = vcmp.ge.s32.totalorder %v289, 1
          %vm332 = vmand %vm330, %vm322
          %vm333 = vmand %vm331, %vm323
          %vm334 = vcmp.ge.s32.totalorder %v288, 0
          %vm335 = vcmp.ge.s32.totalorder %v289, 0
          %vm336 = vmand %vm334, %vm322
          %vm337 = vmand %vm335, %vm323
          %vm338 = vcmp.lt.s32.totalorder %v288, 15
          %vm339 = vcmp.lt.s32.totalorder %v289, 15
          %vm340 = vmand %vm334, %vm338
          %vm341 = vmand %vm335, %vm339
          %vm342 = vcmp.lt.s32.totalorder %v288, 14
          %vm343 = vcmp.lt.s32.totalorder %v289, 14
          %vm344 = vmand %vm334, %vm342
          %vm345 = vmand %vm335, %vm343
          %vm346 = vcmp.lt.s32.totalorder %v288, 13
          %vm347 = vcmp.lt.s32.totalorder %v289, 13
          %vm348 = vmand %vm334, %vm346
          %vm349 = vmand %vm335, %vm347
          %v351 = vlaneseq
          %v352 = vshrl.u32 %v351, 7
          %v353 = vsub.s32 0, %v352
          %v354 = vrot.slane %v283, %v353
          %v355 = vlaneseq
          %v356 = vshrl.u32 %v355, 7
          %v357 = vsub.s32 1, %v356
          %v358 = vrot.slane %v283, %v357
          %361 = vrot.lane.b32.xlu0 %v354, 51
          %v362 = vpop.permute.xlu0 %361
          %363 = vrot.lane.b32.xlu0 %v358, 51
          %v364 = vpop.permute.xlu0 %363
          %vm365 = vcmp.lt.s32.totalorder %v286, 51
          %v366 = vsel %vm365, %v362, %v364
          %v367 = vsel %vm365, %v364, %v362
          %v369 = vlaneseq
          %v370 = vshrl.u32 %v369, 7
          %v371 = vsub.s32 0, %v370
          %v372 = vrot.slane %v284, %v371
          %v373 = vlaneseq
          %v374 = vshrl.u32 %v373, 7
          %v375 = vsub.s32 1, %v374
          %v376 = vrot.slane %v284, %v375
          %379 = vrot.lane.b32.xlu0 %v372, 51
          %v380 = vpop.permute.xlu0 %379
          %381 = vrot.lane.b32.xlu0 %v376, 51
          %v382 = vpop.permute.xlu0 %381
          %v383 = vsel %vm365, %v380, %v382
          %v384 = vsel %vm365, %v382, %v380
          %s385 = sld [smem:[#allocation8]]
          %v386 = vstv %s385
          %v387 = vmul.f32 %v386, %v367
          %v388 = vmul.f32 %v386, %v366
          %s389 = sld [smem:[#allocation8 + $0x31]]
          %v390 = vstv %s389
          %v391 = vmul.f32 %v390, %v384
          %v392 = vmul.f32 %v390, %v383
          %v393 = vadd.f32 %v387, %v391
          %v394 = vadd.f32 %v388, %v392
          %vm395 = vmand %vm294, %vm324
          %vm396 = vmand %vm295, %vm325
          %v397 = vsel %vm395, %v393, 0.0
          %v398 = vsel %vm396, %v394, 0.0
          %v399 = vadd.f32 %v397, 0.0
          %v400 = vadd.f32 %v398, 0.0
          %401 = vrot.lane.b32.xlu0 %v354, 50
          %v402 = vpop.permute.xlu0 %401
          %403 = vrot.lane.b32.xlu0 %v358, 50
          %v404 = vpop.permute.xlu0 %403
          %vm405 = vcmp.lt.s32.totalorder %v286, 50
          %v406 = vsel %vm405, %v402, %v404
          %v407 = vsel %vm405, %v404, %v402
          %408 = vrot.lane.b32.xlu0 %v372, 50
          %v409 = vpop.permute.xlu0 %408
          %410 = vrot.lane.b32.xlu0 %v376, 50
          %v411 = vpop.permute.xlu0 %410
          %v412 = vsel %vm405, %v409, %v411
          %v413 = vsel %vm405, %v411, %v409
          %s414 = sld [smem:[#allocation8 + $0x1]]
          %v415 = vstv %s414
          %v416 = vmul.f32 %v415, %v407
          %v417 = vmul.f32 %v415, %v406
          %s418 = sld [smem:[#allocation8 + $0x32]]
          %v419 = vstv %s418
          %v420 = vmul.f32 %v419, %v413
          %v421 = vmul.f32 %v419, %v412
          %v422 = vadd.f32 %v416, %v420
          %v423 = vadd.f32 %v417, %v421
          %vm424 = vmand %vm294, %vm328
          %vm425 = vmand %vm295, %vm329
          %v426 = vsel %vm424, %v422, 0.0
          %v427 = vsel %vm425, %v423, 0.0
          %v428 = vadd.f32 %v426, 0.0
          %v429 = vadd.f32 %v427, 0.0
          %430 = vrot.lane.b32.xlu0 %v354, 49
          %v431 = vpop.permute.xlu0 %430
          %432 = vrot.lane.b32.xlu0 %v358, 49
          %v433 = vpop.permute.xlu0 %432
          %vm434 = vcmp.lt.s32.totalorder %v286, 49
          %v435 = vsel %vm434, %v431, %v433
          %v436 = vsel %vm434, %v433, %v431
          %437 = vrot.lane.b32.xlu0 %v372, 49
          %v438 = vpop.permute.xlu0 %437
          %439 = vrot.lane.b32.xlu0 %v376, 49
          %v440 = vpop.permute.xlu0 %439
          %v441 = vsel %vm434, %v438, %v440
          %v442 = vsel %vm434, %v440, %v438
          %s443 = sld [smem:[#allocation8 + $0x2]]
          %v444 = vstv %s443
          %v445 = vmul.f32 %v444, %v436
          %v446 = vmul.f32 %v444, %v435
          %s447 = sld [smem:[#allocation8 + $0x33]]
          %v448 = vstv %s447
          %v449 = vmul.f32 %v448, %v442
          %v450 = vmul.f32 %v448, %v441
          %v451 = vadd.f32 %v445, %v449
          %v452 = vadd.f32 %v446, %v450
          %vm453 = vmand %vm294, %vm332
          %vm454 = vmand %vm295, %vm333
          %v455 = vsel %vm453, %v451, 0.0
          %v456 = vsel %vm454, %v452, 0.0
          %v457 = vadd.f32 %v455, 0.0
          %v458 = vadd.f32 %v456, 0.0
          %459 = vrot.lane.b32.xlu0 %v354, 48
          %v460 = vpop.permute.xlu0 %459
          %461 = vrot.lane.b32.xlu0 %v358, 48
          %v462 = vpop.permute.xlu0 %461
          %vm463 = vcmp.lt.s32.totalorder %v286, 48
          %v464 = vsel %vm463, %v460, %v462
          %v465 = vsel %vm463, %v462, %v460
          %466 = vrot.lane.b32.xlu0 %v372, 48
          %v467 = vpop.permute.xlu0 %466
          %468 = vrot.lane.b32.xlu0 %v376, 48
          %v469 = vpop.permute.xlu0 %468
          %v470 = vsel %vm463, %v467, %v469
          %v471 = vsel %vm463, %v469, %v467
          %s472 = sld [smem:[#allocation8 + $0x3]]
          %v473 = vstv %s472
          %v474 = vmul.f32 %v473, %v465
          %v475 = vmul.f32 %v473, %v464
          %s476 = sld [smem:[#allocation8 + $0x34]]
          %v477 = vstv %s476
          %v478 = vmul.f32 %v477, %v471
          %v479 = vmul.f32 %v477, %v470
          %v480 = vadd.f32 %v474, %v478
          %v481 = vadd.f32 %v475, %v479
          %vm482 = vmand %vm294, %vm336
          %vm483 = vmand %vm295, %vm337
          %v484 = vsel %vm482, %v480, 0.0
          %v485 = vsel %vm483, %v481, 0.0
          %v486 = vadd.f32 %v484, 0.0
          %v487 = vadd.f32 %v485, 0.0
          %488 = vrot.lane.b32.xlu0 %v354, 47
          %v489 = vpop.permute.xlu0 %488
          %490 = vrot.lane.b32.xlu0 %v358, 47
          %v491 = vpop.permute.xlu0 %490
          %vm492 = vcmp.lt.s32.totalorder %v286, 47
          %v493 = vsel %vm492, %v489, %v491
          %v494 = vsel %vm492, %v491, %v489
          %495 = vrot.lane.b32.xlu0 %v372, 47
          %v496 = vpop.permute.xlu0 %495
          %497 = vrot.lane.b32.xlu0 %v376, 47
          %v498 = vpop.permute.xlu0 %497
          %v499 = vsel %vm492, %v496, %v498
          %v500 = vsel %vm492, %v498, %v496
          %s501 = sld [smem:[#allocation8 + $0x4]]
          %v502 = vstv %s501
          %v503 = vmul.f32 %v502, %v494
          %v504 = vmul.f32 %v502, %v493
          %s505 = sld [smem:[#allocation8 + $0x35]]
          %v506 = vstv %s505
          %v507 = vmul.f32 %v506, %v500
          %v508 = vmul.f32 %v506, %v499
          %v509 = vadd.f32 %v503, %v507
          %v510 = vadd.f32 %v504, %v508
          %vm511 = vmand %vm294, %vm340
          %vm512 = vmand %vm295, %vm341
          %v513 = vsel %vm511, %v509, 0.0
          %v514 = vsel %vm512, %v510, 0.0
          %v515 = vadd.f32 %v399, %v513
          %v516 = vadd.f32 %v400, %v514
          %517 = vrot.lane.b32.xlu0 %v354, 46
          %v518 = vpop.permute.xlu0 %517
          %519 = vrot.lane.b32.xlu0 %v358, 46
          %v520 = vpop.permute.xlu0 %519
          %vm521 = vcmp.lt.s32.totalorder %v286, 46
          %v522 = vsel %vm521, %v518, %v520
          %v523 = vsel %vm521, %v520, %v518
          %524 = vrot.lane.b32.xlu0 %v372, 46
          %v525 = vpop.permute.xlu0 %524
          %526 = vrot.lane.b32.xlu0 %v376, 46
          %v527 = vpop.permute.xlu0 %526
          %v528 = vsel %vm521, %v525, %v527
          %v529 = vsel %vm521, %v527, %v525
          %s530 = sld [smem:[#allocation8 + $0x5]]
          %v531 = vstv %s530
          %v532 = vmul.f32 %v531, %v523
          %v533 = vmul.f32 %v531, %v522
          %s534 = sld [smem:[#allocation8 + $0x36]]
          %v535 = vstv %s534
          %v536 = vmul.f32 %v535, %v529
          %v537 = vmul.f32 %v535, %v528
          %v538 = vadd.f32 %v532, %v536
          %v539 = vadd.f32 %v533, %v537
          %vm540 = vmand %vm294, %vm344
          %vm541 = vmand %vm295, %vm345
          %v542 = vsel %vm540, %v538, 0.0
          %v543 = vsel %vm541, %v539, 0.0
          %v544 = vadd.f32 %v428, %v542
          %v545 = vadd.f32 %v429, %v543
          %546 = vrot.lane.b32.xlu0 %v354, 45
          %v547 = vpop.permute.xlu0 %546
          %548 = vrot.lane.b32.xlu0 %v358, 45
          %v549 = vpop.permute.xlu0 %548
          %vm550 = vcmp.lt.s32.totalorder %v286, 45
          %v551 = vsel %vm550, %v547, %v549
          %v552 = vsel %vm550, %v549, %v547
          %553 = vrot.lane.b32.xlu0 %v372, 45
          %v554 = vpop.permute.xlu0 %553
          %555 = vrot.lane.b32.xlu0 %v376, 45
          %v556 = vpop.permute.xlu0 %555
          %v557 = vsel %vm550, %v554, %v556
          %v558 = vsel %vm550, %v556, %v554
          %s559 = sld [smem:[#allocation8 + $0x6]]
          %v560 = vstv %s559
          %v561 = vmul.f32 %v560, %v552
          %v562 = vmul.f32 %v560, %v551
          %s563 = sld [smem:[#allocation8 + $0x37]]
          %v564 = vstv %s563
          %v565 = vmul.f32 %v564, %v558
          %v566 = vmul.f32 %v564, %v557
          %v567 = vadd.f32 %v561, %v565
          %v568 = vadd.f32 %v562, %v566
          %vm569 = vmand %vm294, %vm348
          %vm570 = vmand %vm295, %vm349
          %v571 = vsel %vm569, %v567, 0.0
          %v572 = vsel %vm570, %v568, 0.0
          %v573 = vadd.f32 %v457, %v571
          %v574 = vadd.f32 %v458, %v572
          %575 = vrot.lane.b32.xlu0 %v354, 35
          %v576 = vpop.permute.xlu0 %575
          %577 = vrot.lane.b32.xlu0 %v358, 35
          %v578 = vpop.permute.xlu0 %577
          %vm579 = vcmp.lt.s32.totalorder %v286, 35
          %v580 = vsel %vm579, %v576, %v578
          %v581 = vsel %vm579, %v578, %v576
          %582 = vrot.lane.b32.xlu0 %v372, 35
          %v583 = vpop.permute.xlu0 %582
          %584 = vrot.lane.b32.xlu0 %v376, 35
          %v585 = vpop.permute.xlu0 %584
          %v586 = vsel %vm579, %v583, %v585
          %v587 = vsel %vm579, %v585, %v583
          %s588 = sld [smem:[#allocation8 + $0x7]]
          %v589 = vstv %s588
          %v590 = vmul.f32 %v589, %v581
          %v591 = vmul.f32 %v589, %v580
          %s592 = sld [smem:[#allocation8 + $0x38]]
          %v593 = vstv %s592
          %v594 = vmul.f32 %v593, %v587
          %v595 = vmul.f32 %v593, %v586
          %v596 = vadd.f32 %v590, %v594
          %v597 = vadd.f32 %v591, %v595
          %vm598 = vmand %vm298, %vm324
          %vm599 = vmand %vm299, %vm325
          %v600 = vsel %vm598, %v596, 0.0
          %v601 = vsel %vm599, %v597, 0.0
          %v602 = vadd.f32 %v486, %v600
          %v603 = vadd.f32 %v487, %v601
          %604 = vrot.lane.b32.xlu0 %v354, 34
          %v605 = vpop.permute.xlu0 %604
          %606 = vrot.lane.b32.xlu0 %v358, 34
          %v607 = vpop.permute.xlu0 %606
          %vm608 = vcmp.lt.s32.totalorder %v286, 34
          %v609 = vsel %vm608, %v605, %v607
          %v610 = vsel %vm608, %v607, %v605
          %611 = vrot.lane.b32.xlu0 %v372, 34
          %v612 = vpop.permute.xlu0 %611
          %613 = vrot.lane.b32.xlu0 %v376, 34
          %v614 = vpop.permute.xlu0 %613
          %v615 = vsel %vm608, %v612, %v614
          %v616 = vsel %vm608, %v614, %v612
          %s617 = sld [smem:[#allocation8 + $0x8]]
          %v618 = vstv %s617
          %v619 = vmul.f32 %v618, %v610
          %v620 = vmul.f32 %v618, %v609
          %s621 = sld [smem:[#allocation8 + $0x39]]
          %v622 = vstv %s621
          %v623 = vmul.f32 %v622, %v616
          %v624 = vmul.f32 %v622, %v615
          %v625 = vadd.f32 %v619, %v623
          %v626 = vadd.f32 %v620, %v624
          %vm627 = vmand %vm298, %vm328
          %vm628 = vmand %vm299, %vm329
          %v629 = vsel %vm627, %v625, 0.0
          %v630 = vsel %vm628, %v626, 0.0
          %v631 = vadd.f32 %v515, %v629
          %v632 = vadd.f32 %v516, %v630
          %633 = vrot.lane.b32.xlu0 %v354, 33
          %v634 = vpop.permute.xlu0 %633
          %635 = vrot.lane.b32.xlu0 %v358, 33
          %v636 = vpop.permute.xlu0 %635
          %vm637 = vcmp.lt.s32.totalorder %v286, 33
          %v638 = vsel %vm637, %v634, %v636
          %v639 = vsel %vm637, %v636, %v634
          %640 = vrot.lane.b32.xlu0 %v372, 33
          %v641 = vpop.permute.xlu0 %640
          %642 = vrot.lane.b32.xlu0 %v376, 33
          %v643 = vpop.permute.xlu0 %642
          %v644 = vsel %vm637, %v641, %v643
          %v645 = vsel %vm637, %v643, %v641
          %s646 = sld [smem:[#allocation8 + $0x9]]
          %v647 = vstv %s646
          %v648 = vmul.f32 %v647, %v639
          %v649 = vmul.f32 %v647, %v638
          %s650 = sld [smem:[#allocation8 + $0x3a]]
          %v651 = vstv %s650
          %v652 = vmul.f32 %v651, %v645
          %v653 = vmul.f32 %v651, %v644
          %v654 = vadd.f32 %v648, %v652
          %v655 = vadd.f32 %v649, %v653
          %vm656 = vmand %vm298, %vm332
          %vm657 = vmand %vm299, %vm333
          %v658 = vsel %vm656, %v654, 0.0
          %v659 = vsel %vm657, %v655, 0.0
          %v660 = vadd.f32 %v544, %v658
          %v661 = vadd.f32 %v545, %v659
          %662 = vrot.lane.b32.xlu0 %v354, 32
          %v663 = vpop.permute.xlu0 %662
          %664 = vrot.lane.b32.xlu0 %v358, 32
          %v665 = vpop.permute.xlu0 %664
          %vm666 = vcmp.lt.s32.totalorder %v286, 32
          %v667 = vsel %vm666, %v663, %v665
          %v668 = vsel %vm666, %v665, %v663
          %669 = vrot.lane.b32.xlu0 %v372, 32
          %v670 = vpop.permute.xlu0 %669
          %671 = vrot.lane.b32.xlu0 %v376, 32
          %v672 = vpop.permute.xlu0 %671
          %v673 = vsel %vm666, %v670, %v672
          %v674 = vsel %vm666, %v672, %v670
          %s675 = sld [smem:[#allocation8 + $0xa]]
          %v676 = vstv %s675
          %v677 = vmul.f32 %v676, %v668
          %v678 = vmul.f32 %v676, %v667
          %s679 = sld [smem:[#allocation8 + $0x3b]]
          %v680 = vstv %s679
          %v681 = vmul.f32 %v680, %v674
          %v682 = vmul.f32 %v680, %v673
          %v683 = vadd.f32 %v677, %v681
          %v684 = vadd.f32 %v678, %v682
          %vm685 = vmand %vm298, %vm336
          %vm686 = vmand %vm299, %vm337
          %v687 = vsel %vm685, %v683, 0.0
          %v688 = vsel %vm686, %v684, 0.0
          %v689 = vadd.f32 %v573, %v687
          %v690 = vadd.f32 %v574, %v688
          %691 = vrot.lane.b32.xlu0 %v354, 31
          %v692 = vpop.permute.xlu0 %691
          %693 = vrot.lane.b32.xlu0 %v358, 31
          %v694 = vpop.permute.xlu0 %693
          %vm695 = vcmp.lt.s32.totalorder %v286, 31
          %v696 = vsel %vm695, %v692, %v694
          %v697 = vsel %vm695, %v694, %v692
          %698 = vrot.lane.b32.xlu0 %v372, 31
          %v699 = vpop.permute.xlu0 %698
          %700 = vrot.lane.b32.xlu0 %v376, 31
          %v701 = vpop.permute.xlu0 %700
          %v702 = vsel %vm695, %v699, %v701
          %v703 = vsel %vm695, %v701, %v699
          %s704 = sld [smem:[#allocation8 + $0xb]]
          %v705 = vstv %s704
          %v706 = vmul.f32 %v705, %v697
          %v707 = vmul.f32 %v705, %v696
          %s708 = sld [smem:[#allocation8 + $0x3c]]
          %v709 = vstv %s708
          %v710 = vmul.f32 %v709, %v703
          %v711 = vmul.f32 %v709, %v702
          %v712 = vadd.f32 %v706, %v710
          %v713 = vadd.f32 %v707, %v711
          %vm714 = vmand %vm298, %vm340
          %vm715 = vmand %vm299, %vm341
          %v716 = vsel %vm714, %v712, 0.0
          %v717 = vsel %vm715, %v713, 0.0
          %v718 = vadd.f32 %v602, %v716
          %v719 = vadd.f32 %v603, %v717
          %720 = vrot.lane.b32.xlu0 %v354, 30
          %v721 = vpop.permute.xlu0 %720
          %722 = vrot.lane.b32.xlu0 %v358, 30
          %v723 = vpop.permute.xlu0 %722
          %vm724 = vcmp.lt.s32.totalorder %v286, 30
          %v725 = vsel %vm724, %v721, %v723
          %v726 = vsel %vm724, %v723, %v721
          %727 = vrot.lane.b32.xlu0 %v372, 30
          %v728 = vpop.permute.xlu0 %727
          %729 = vrot.lane.b32.xlu0 %v376, 30
          %v730 = vpop.permute.xlu0 %729
          %v731 = vsel %vm724, %v728, %v730
          %v732 = vsel %vm724, %v730, %v728
          %s733 = sld [smem:[#allocation8 + $0xc]]
          %v734 = vstv %s733
          %v735 = vmul.f32 %v734, %v726
          %v736 = vmul.f32 %v734, %v725
          %s737 = sld [smem:[#allocation8 + $0x3d]]
          %v738 = vstv %s737
          %v739 = vmul.f32 %v738, %v732
          %v740 = vmul.f32 %v738, %v731
          %v741 = vadd.f32 %v735, %v739
          %v742 = vadd.f32 %v736, %v740
          %vm743 = vmand %vm298, %vm344
          %vm744 = vmand %vm299, %vm345
          %v745 = vsel %vm743, %v741, 0.0
          %v746 = vsel %vm744, %v742, 0.0
          %v747 = vadd.f32 %v631, %v745
          %v748 = vadd.f32 %v632, %v746
          %749 = vrot.lane.b32.xlu0 %v354, 29
          %v750 = vpop.permute.xlu0 %749
          %751 = vrot.lane.b32.xlu0 %v358, 29
          %v752 = vpop.permute.xlu0 %751
          %vm753 = vcmp.lt.s32.totalorder %v286, 29
          %v754 = vsel %vm753, %v750, %v752
          %v755 = vsel %vm753, %v752, %v750
          %756 = vrot.lane.b32.xlu0 %v372, 29
          %v757 = vpop.permute.xlu0 %756
          %758 = vrot.lane.b32.xlu0 %v376, 29
          %v759 = vpop.permute.xlu0 %758
          %v760 = vsel %vm753, %v757, %v759
          %v761 = vsel %vm753, %v759, %v757
          %s762 = sld [smem:[#allocation8 + $0xd]]
          %v763 = vstv %s762
          %v764 = vmul.f32 %v763, %v755
          %v765 = vmul.f32 %v763, %v754
          %s766 = sld [smem:[#allocation8 + $0x3e]]
          %v767 = vstv %s766
          %v768 = vmul.f32 %v767, %v761
          %v769 = vmul.f32 %v767, %v760
          %v770 = vadd.f32 %v764, %v768
          %v771 = vadd.f32 %v765, %v769
          %vm772 = vmand %vm298, %vm348
          %vm773 = vmand %vm299, %vm349
          %v774 = vsel %vm772, %v770, 0.0
          %v775 = vsel %vm773, %v771, 0.0
          %v776 = vadd.f32 %v660, %v774
          %v777 = vadd.f32 %v661, %v775
          %778 = vrot.lane.b32.xlu0 %v354, 19
          %v779 = vpop.permute.xlu0 %778
          %780 = vrot.lane.b32.xlu0 %v358, 19
          %v781 = vpop.permute.xlu0 %780
          %vm782 = vcmp.lt.s32.totalorder %v286, 19
          %v783 = vsel %vm782, %v779, %v781
          %v784 = vsel %vm782, %v781, %v779
          %785 = vrot.lane.b32.xlu0 %v372, 19
          %v786 = vpop.permute.xlu0 %785
          %787 = vrot.lane.b32.xlu0 %v376, 19
          %v788 = vpop.permute.xlu0 %787
          %v789 = vsel %vm782, %v786, %v788
          %v790 = vsel %vm782, %v788, %v786
          %s791 = sld [smem:[#allocation8 + $0xe]]
          %v792 = vstv %s791
          %v793 = vmul.f32 %v792, %v784
          %v794 = vmul.f32 %v792, %v783
          %s795 = sld [smem:[#allocation8 + $0x3f]]
          %v796 = vstv %s795
          %v797 = vmul.f32 %v796, %v790
          %v798 = vmul.f32 %v796, %v789
          %v799 = vadd.f32 %v793, %v797
          %v800 = vadd.f32 %v794, %v798
          %vm801 = vmand %vm302, %vm324
          %vm802 = vmand %vm303, %vm325
          %v803 = vsel %vm801, %v799, 0.0
          %v804 = vsel %vm802, %v800, 0.0
          %v805 = vadd.f32 %v689, %v803
          %v806 = vadd.f32 %v690, %v804
          %807 = vrot.lane.b32.xlu0 %v354, 18
          %v808 = vpop.permute.xlu0 %807
          %809 = vrot.lane.b32.xlu0 %v358, 18
          %v810 = vpop.permute.xlu0 %809
          %vm811 = vcmp.lt.s32.totalorder %v286, 18
          %v812 = vsel %vm811, %v808, %v810
          %v813 = vsel %vm811, %v810, %v808
          %814 = vrot.lane.b32.xlu0 %v372, 18
          %v815 = vpop.permute.xlu0 %814
          %816 = vrot.lane.b32.xlu0 %v376, 18
          %v817 = vpop.permute.xlu0 %816
          %v818 = vsel %vm811, %v815, %v817
          %v819 = vsel %vm811, %v817, %v815
          %s820 = sld [smem:[#allocation8 + $0xf]]
          %v821 = vstv %s820
          %v822 = vmul.f32 %v821, %v813
          %v823 = vmul.f32 %v821, %v812
          %s824 = sld [smem:[#allocation8 + $0x40]]
          %v825 = vstv %s824
          %v826 = vmul.f32 %v825, %v819
          %v827 = vmul.f32 %v825, %v818
          %v828 = vadd.f32 %v822, %v826
          %v829 = vadd.f32 %v823, %v827
          %vm830 = vmand %vm302, %vm328
          %vm831 = vmand %vm303, %vm329
          %v832 = vsel %vm830, %v828, 0.0
          %v833 = vsel %vm831, %v829, 0.0
          %v834 = vadd.f32 %v718, %v832
          %v835 = vadd.f32 %v719, %v833
          %836 = vrot.lane.b32.xlu0 %v354, 17
          %v837 = vpop.permute.xlu0 %836
          %838 = vrot.lane.b32.xlu0 %v358, 17
          %v839 = vpop.permute.xlu0 %838
          %vm840 = vcmp.lt.s32.totalorder %v286, 17
          %v841 = vsel %vm840, %v837, %v839
          %v842 = vsel %vm840, %v839, %v837
          %843 = vrot.lane.b32.xlu0 %v372, 17
          %v844 = vpop.permute.xlu0 %843
          %845 = vrot.lane.b32.xlu0 %v376, 17
          %v846 = vpop.permute.xlu0 %845
          %v847 = vsel %vm840, %v844, %v846
          %v848 = vsel %vm840, %v846, %v844
          %s849 = sld [smem:[#allocation8 + $0x10]]
          %v850 = vstv %s849
          %v851 = vmul.f32 %v850, %v842
          %v852 = vmul.f32 %v850, %v841
          %s853 = sld [smem:[#allocation8 + $0x41]]
          %v854 = vstv %s853
          %v855 = vmul.f32 %v854, %v848
          %v856 = vmul.f32 %v854, %v847
          %v857 = vadd.f32 %v851, %v855
          %v858 = vadd.f32 %v852, %v856
          %vm859 = vmand %vm302, %vm332
          %vm860 = vmand %vm303, %vm333
          %v861 = vsel %vm859, %v857, 0.0
          %v862 = vsel %vm860, %v858, 0.0
          %v863 = vadd.f32 %v747, %v861
          %v864 = vadd.f32 %v748, %v862
          %865 = vrot.lane.b32.xlu0 %v354, 16
          %v866 = vpop.permute.xlu0 %865
          %867 = vrot.lane.b32.xlu0 %v358, 16
          %v868 = vpop.permute.xlu0 %867
          %vm869 = vcmp.lt.s32.totalorder %v286, 16
          %v870 = vsel %vm869, %v866, %v868
          %v871 = vsel %vm869, %v868, %v866
          %872 = vrot.lane.b32.xlu0 %v372, 16
          %v873 = vpop.permute.xlu0 %872
          %874 = vrot.lane.b32.xlu0 %v376, 16
          %v875 = vpop.permute.xlu0 %874
          %v876 = vsel %vm869, %v873, %v875
          %v877 = vsel %vm869, %v875, %v873
          %s878 = sld [smem:[#allocation8 + $0x11]]
          %v879 = vstv %s878
          %v880 = vmul.f32 %v879, %v871
          %v881 = vmul.f32 %v879, %v870
          %s882 = sld [smem:[#allocation8 + $0x42]]
          %v883 = vstv %s882
          %v884 = vmul.f32 %v883, %v877
          %v885 = vmul.f32 %v883, %v876
          %v886 = vadd.f32 %v880, %v884
          %v887 = vadd.f32 %v881, %v885
          %vm888 = vmand %vm302, %vm336
          %vm889 = vmand %vm303, %vm337
          %v890 = vsel %vm888, %v886, 0.0
          %v891 = vsel %vm889, %v887, 0.0
          %v892 = vadd.f32 %v776, %v890
          %v893 = vadd.f32 %v777, %v891
          %894 = vrot.lane.b32.xlu0 %v354, 15
          %v895 = vpop.permute.xlu0 %894
          %896 = vrot.lane.b32.xlu0 %v358, 15
          %v897 = vpop.permute.xlu0 %896
          %vm898 = vcmp.lt.s32.totalorder %v286, 15
          %v899 = vsel %vm898, %v895, %v897
          %v900 = vsel %vm898, %v897, %v895
          %901 = vrot.lane.b32.xlu0 %v372, 15
          %v902 = vpop.permute.xlu0 %901
          %903 = vrot.lane.b32.xlu0 %v376, 15
          %v904 = vpop.permute.xlu0 %903
          %v905 = vsel %vm898, %v902, %v904
          %v906 = vsel %vm898, %v904, %v902
          %s907 = sld [smem:[#allocation8 + $0x12]]
          %v908 = vstv %s907
          %v909 = vmul.f32 %v908, %v900
          %v910 = vmul.f32 %v908, %v899
          %s911 = sld [smem:[#allocation8 + $0x43]]
          %v912 = vstv %s911
          %v913 = vmul.f32 %v912, %v906
          %v914 = vmul.f32 %v912, %v905
          %v915 = vadd.f32 %v909, %v913
          %v916 = vadd.f32 %v910, %v914
          %vm917 = vmand %vm302, %vm340
          %vm918 = vmand %vm303, %vm341
          %v919 = vsel %vm917, %v915, 0.0
          %v920 = vsel %vm918, %v916, 0.0
          %v921 = vadd.f32 %v805, %v919
          %v922 = vadd.f32 %v806, %v920
          %923 = vrot.lane.b32.xlu0 %v354, 14
          %v924 = vpop.permute.xlu0 %923
          %925 = vrot.lane.b32.xlu0 %v358, 14
          %v926 = vpop.permute.xlu0 %925
          %vm927 = vcmp.lt.s32.totalorder %v286, 14
          %v928 = vsel %vm927, %v924, %v926
          %v929 = vsel %vm927, %v926, %v924
          %930 = vrot.lane.b32.xlu0 %v372, 14
          %v931 = vpop.permute.xlu0 %930
          %932 = vrot.lane.b32.xlu0 %v376, 14
          %v933 = vpop.permute.xlu0 %932
          %v934 = vsel %vm927, %v931, %v933
          %v935 = vsel %vm927, %v933, %v931
          %s936 = sld [smem:[#allocation8 + $0x13]]
          %v937 = vstv %s936
          %v938 = vmul.f32 %v937, %v929
          %v939 = vmul.f32 %v937, %v928
          %s940 = sld [smem:[#allocation8 + $0x44]]
          %v941 = vstv %s940
          %v942 = vmul.f32 %v941, %v935
          %v943 = vmul.f32 %v941, %v934
          %v944 = vadd.f32 %v938, %v942
          %v945 = vadd.f32 %v939, %v943
          %vm946 = vmand %vm302, %vm344
          %vm947 = vmand %vm303, %vm345
          %v948 = vsel %vm946, %v944, 0.0
          %v949 = vsel %vm947, %v945, 0.0
          %v950 = vadd.f32 %v834, %v948
          %v951 = vadd.f32 %v835, %v949
          %952 = vrot.lane.b32.xlu0 %v354, 13
          %v953 = vpop.permute.xlu0 %952
          %954 = vrot.lane.b32.xlu0 %v358, 13
          %v955 = vpop.permute.xlu0 %954
          %vm956 = vcmp.lt.s32.totalorder %v286, 13
          %v957 = vsel %vm956, %v953, %v955
          %v958 = vsel %vm956, %v955, %v953
          %959 = vrot.lane.b32.xlu0 %v372, 13
          %v960 = vpop.permute.xlu0 %959
          %961 = vrot.lane.b32.xlu0 %v376, 13
          %v962 = vpop.permute.xlu0 %961
          %v963 = vsel %vm956, %v960, %v962
          %v964 = vsel %vm956, %v962, %v960
          %s965 = sld [smem:[#allocation8 + $0x14]]
          %v966 = vstv %s965
          %v967 = vmul.f32 %v966, %v958
          %v968 = vmul.f32 %v966, %v957
          %s969 = sld [smem:[#allocation8 + $0x45]]
          %v970 = vstv %s969
          %v971 = vmul.f32 %v970, %v964
          %v972 = vmul.f32 %v970, %v963
          %v973 = vadd.f32 %v967, %v971
          %v974 = vadd.f32 %v968, %v972
          %vm975 = vmand %vm302, %vm348
          %vm976 = vmand %vm303, %vm349
          %v977 = vsel %vm975, %v973, 0.0
          %v978 = vsel %vm976, %v974, 0.0
          %v979 = vadd.f32 %v863, %v977
          %v980 = vadd.f32 %v864, %v978
          %981 = vrot.lane.b32.xlu0 %v354, 3
          %v982 = vpop.permute.xlu0 %981
          %983 = vrot.lane.b32.xlu0 %v358, 3
          %v984 = vpop.permute.xlu0 %983
          %vm985 = vcmp.lt.s32.totalorder %v286, 3
          %v986 = vsel %vm985, %v982, %v984
          %v987 = vsel %vm985, %v984, %v982
          %988 = vrot.lane.b32.xlu0 %v372, 3
          %v989 = vpop.permute.xlu0 %988
          %990 = vrot.lane.b32.xlu0 %v376, 3
          %v991 = vpop.permute.xlu0 %990
          %v992 = vsel %vm985, %v989, %v991
          %v993 = vsel %vm985, %v991, %v989
          %s994 = sld [smem:[#allocation8 + $0x15]]
          %v995 = vstv %s994
          %v996 = vmul.f32 %v995, %v987
          %v997 = vmul.f32 %v995, %v986
          %s998 = sld [smem:[#allocation8 + $0x46]]
          %v999 = vstv %s998
          %v1000 = vmul.f32 %v999, %v993
          %v1001 = vmul.f32 %v999, %v992
          %v1002 = vadd.f32 %v996, %v1000
          %v1003 = vadd.f32 %v997, %v1001
          %vm1004 = vmand %vm306, %vm324
          %vm1005 = vmand %vm307, %vm325
          %v1006 = vsel %vm1004, %v1002, 0.0
          %v1007 = vsel %vm1005, %v1003, 0.0
          %v1008 = vadd.f32 %v892, %v1006
          %v1009 = vadd.f32 %v893, %v1007
          %1010 = vrot.lane.b32.xlu0 %v354, 2
          %v1011 = vpop.permute.xlu0 %1010
          %1012 = vrot.lane.b32.xlu0 %v358, 2
          %v1013 = vpop.permute.xlu0 %1012
          %vm1014 = vcmp.lt.s32.totalorder %v286, 2
          %v1015 = vsel %vm1014, %v1011, %v1013
          %v1016 = vsel %vm1014, %v1013, %v1011
          %1017 = vrot.lane.b32.xlu0 %v372, 2
          %v1018 = vpop.permute.xlu0 %1017
          %1019 = vrot.lane.b32.xlu0 %v376, 2
          %v1020 = vpop.permute.xlu0 %1019
          %v1021 = vsel %vm1014, %v1018, %v1020
          %v1022 = vsel %vm1014, %v1020, %v1018
          %s1023 = sld [smem:[#allocation8 + $0x16]]
          %v1024 = vstv %s1023
          %v1025 = vmul.f32 %v1024, %v1016
          %v1026 = vmul.f32 %v1024, %v1015
          %s1027 = sld [smem:[#allocation8 + $0x47]]
          %v1028 = vstv %s1027
          %v1029 = vmul.f32 %v1028, %v1022
          %v1030 = vmul.f32 %v1028, %v1021
          %v1031 = vadd.f32 %v1025, %v1029
          %v1032 = vadd.f32 %v1026, %v1030
          %vm1033 = vmand %vm306, %vm328
          %vm1034 = vmand %vm307, %vm329
          %v1035 = vsel %vm1033, %v1031, 0.0
          %v1036 = vsel %vm1034, %v1032, 0.0
          %v1037 = vadd.f32 %v921, %v1035
          %v1038 = vadd.f32 %v922, %v1036
          %1039 = vrot.lane.b32.xlu0 %v354, 1
          %v1040 = vpop.permute.xlu0 %1039
          %1041 = vrot.lane.b32.xlu0 %v358, 1
          %v1042 = vpop.permute.xlu0 %1041
          %vm1043 = vcmp.lt.s32.totalorder %v286, 1
          %v1044 = vsel %vm1043, %v1040, %v1042
          %v1045 = vsel %vm1043, %v1042, %v1040
          %1046 = vrot.lane.b32.xlu0 %v372, 1
          %v1047 = vpop.permute.xlu0 %1046
          %1048 = vrot.lane.b32.xlu0 %v376, 1
          %v1049 = vpop.permute.xlu0 %1048
          %v1050 = vsel %vm1043, %v1047, %v1049
          %v1051 = vsel %vm1043, %v1049, %v1047
          %s1052 = sld [smem:[#allocation8 + $0x17]]
          %v1053 = vstv %s1052
          %v1054 = vmul.f32 %v1053, %v1045
          %v1055 = vmul.f32 %v1053, %v1044
          %s1056 = sld [smem:[#allocation8 + $0x48]]
          %v1057 = vstv %s1056
          %v1058 = vmul.f32 %v1057, %v1051
          %v1059 = vmul.f32 %v1057, %v1050
          %v1060 = vadd.f32 %v1054, %v1058
          %v1061 = vadd.f32 %v1055, %v1059
          %vm1062 = vmand %vm306, %vm332
          %vm1063 = vmand %vm307, %vm333
          %v1064 = vsel %vm1062, %v1060, 0.0
          %v1065 = vsel %vm1063, %v1061, 0.0
          %v1066 = vadd.f32 %v950, %v1064
          %v1067 = vadd.f32 %v951, %v1065
          %s1068 = sld [smem:[#allocation8 + $0x18]]
          %v1069 = vstv %s1068
          %v1070 = vmul.f32 %v1069, %v283
          %s1071 = sld [smem:[#allocation8 + $0x49]]
          %v1072 = vstv %s1071
          %v1073 = vmul.f32 %v1072, %v284
          %v1074 = vadd.f32 %v1070, %v1073
          %vm1075 = vmand %vm306, %vm336
          %vm1076 = vmand %vm307, %vm337
          %v1078 = vlaneseq
          %v1079 = vshrl.u32 %v1078, 7
          %v1080 = vsub.s32 0, %v1079
          %v1081 = vrot.slane %v1074, %v1080
          %v1082 = vlaneseq
          %v1083 = vshrl.u32 %v1082, 7
          %v1084 = vsub.s32 1, %v1083
          %v1085 = vrot.slane %v1074, %v1084
          %v1088 = vsel %vm1075, %v1081, 0.0
          %v1089 = vsel %vm1076, %v1085, 0.0
          %v1090 = vadd.f32 %v979, %v1088
          %v1091 = vadd.f32 %v980, %v1089
          %1092 = vrot.lane.b32.xlu0 %v354, 127
          %v1093 = vpop.permute.xlu0 %1092
          %1094 = vrot.lane.b32.xlu0 %v358, 127
          %v1095 = vpop.permute.xlu0 %1094
          %vm1096 = vcmp.lt.s32.totalorder %v286, 127
          %v1097 = vsel %vm1096, %v1093, %v1095
          %v1098 = vsel %vm1096, %v1095, %v1093
          %1099 = vrot.lane.b32.xlu0 %v372, 127
          %v1100 = vpop.permute.xlu0 %1099
          %1101 = vrot.lane.b32.xlu0 %v376, 127
          %v1102 = vpop.permute.xlu0 %1101
          %v1103 = vsel %vm1096, %v1100, %v1102
          %v1104 = vsel %vm1096, %v1102, %v1100
          %s1105 = sld [smem:[#allocation8 + $0x19]]
          %v1106 = vstv %s1105
          %v1107 = vmul.f32 %v1106, %v1097
          %v1108 = vmul.f32 %v1106, %v1098
          %s1109 = sld [smem:[#allocation8 + $0x4a]]
          %v1110 = vstv %s1109
          %v1111 = vmul.f32 %v1110, %v1103
          %v1112 = vmul.f32 %v1110, %v1104
          %v1113 = vadd.f32 %v1107, %v1111
          %v1114 = vadd.f32 %v1108, %v1112
          %vm1115 = vmand %vm306, %vm340
          %vm1116 = vmand %vm307, %vm341
          %v1117 = vsel %vm1115, %v1113, 0.0
          %v1118 = vsel %vm1116, %v1114, 0.0
          %v1119 = vadd.f32 %v1008, %v1117
          %v1120 = vadd.f32 %v1009, %v1118
          %1121 = vrot.lane.b32.xlu0 %v354, 126
          %v1122 = vpop.permute.xlu0 %1121
          %1123 = vrot.lane.b32.xlu0 %v358, 126
          %v1124 = vpop.permute.xlu0 %1123
          %vm1125 = vcmp.lt.s32.totalorder %v286, 126
          %v1126 = vsel %vm1125, %v1122, %v1124
          %v1127 = vsel %vm1125, %v1124, %v1122
          %1128 = vrot.lane.b32.xlu0 %v372, 126
          %v1129 = vpop.permute.xlu0 %1128
          %1130 = vrot.lane.b32.xlu0 %v376, 126
          %v1131 = vpop.permute.xlu0 %1130
          %v1132 = vsel %vm1125, %v1129, %v1131
          %v1133 = vsel %vm1125, %v1131, %v1129
          %s1134 = sld [smem:[#allocation8 + $0x1a]]
          %v1135 = vstv %s1134
          %v1136 = vmul.f32 %v1135, %v1126
          %v1137 = vmul.f32 %v1135, %v1127
          %s1138 = sld [smem:[#allocation8 + $0x4b]]
          %v1139 = vstv %s1138
          %v1140 = vmul.f32 %v1139, %v1132
          %v1141 = vmul.f32 %v1139, %v1133
          %v1142 = vadd.f32 %v1136, %v1140
          %v1143 = vadd.f32 %v1137, %v1141
          %vm1144 = vmand %vm306, %vm344
          %vm1145 = vmand %vm307, %vm345
          %v1146 = vsel %vm1144, %v1142, 0.0
          %v1147 = vsel %vm1145, %v1143, 0.0
          %v1148 = vadd.f32 %v1037, %v1146
          %v1149 = vadd.f32 %v1038, %v1147
          %1150 = vrot.lane.b32.xlu0 %v354, 125
          %v1151 = vpop.permute.xlu0 %1150
          %1152 = vrot.lane.b32.xlu0 %v358, 125
          %v1153 = vpop.permute.xlu0 %1152
          %vm1154 = vcmp.lt.s32.totalorder %v286, 125
          %v1155 = vsel %vm1154, %v1151, %v1153
          %v1156 = vsel %vm1154, %v1153, %v1151
          %1157 = vrot.lane.b32.xlu0 %v372, 125
          %v1158 = vpop.permute.xlu0 %1157
          %1159 = vrot.lane.b32.xlu0 %v376, 125
          %v1160 = vpop.permute.xlu0 %1159
          %v1161 = vsel %vm1154, %v1158, %v1160
          %v1162 = vsel %vm1154, %v1160, %v1158
          %s1163 = sld [smem:[#allocation8 + $0x1b]]
          %v1164 = vstv %s1163
          %v1165 = vmul.f32 %v1164, %v1155
          %v1166 = vmul.f32 %v1164, %v1156
          %s1167 = sld [smem:[#allocation8 + $0x4c]]
          %v1168 = vstv %s1167
          %v1169 = vmul.f32 %v1168, %v1161
          %v1170 = vmul.f32 %v1168, %v1162
          %v1171 = vadd.f32 %v1165, %v1169
          %v1172 = vadd.f32 %v1166, %v1170
          %vm1173 = vmand %vm306, %vm348
          %vm1174 = vmand %vm307, %vm349
          %v1175 = vsel %vm1173, %v1171, 0.0
          %v1176 = vsel %vm1174, %v1172, 0.0
          %v1177 = vadd.f32 %v1066, %v1175
          %v1178 = vadd.f32 %v1067, %v1176
          %1179 = vrot.lane.b32.xlu0 %v354, 115
          %v1180 = vpop.permute.xlu0 %1179
          %1181 = vrot.lane.b32.xlu0 %v358, 115
          %v1182 = vpop.permute.xlu0 %1181
          %vm1183 = vcmp.lt.s32.totalorder %v286, 115
          %v1184 = vsel %vm1183, %v1180, %v1182
          %v1185 = vsel %vm1183, %v1182, %v1180
          %1186 = vrot.lane.b32.xlu0 %v372, 115
          %v1187 = vpop.permute.xlu0 %1186
          %1188 = vrot.lane.b32.xlu0 %v376, 115
          %v1189 = vpop.permute.xlu0 %1188
          %v1190 = vsel %vm1183, %v1187, %v1189
          %v1191 = vsel %vm1183, %v1189, %v1187
          %s1192 = sld [smem:[#allocation8 + $0x1c]]
          %v1193 = vstv %s1192
          %v1194 = vmul.f32 %v1193, %v1184
          %v1195 = vmul.f32 %v1193, %v1185
          %s1196 = sld [smem:[#allocation8 + $0x4d]]
          %v1197 = vstv %s1196
          %v1198 = vmul.f32 %v1197, %v1190
          %v1199 = vmul.f32 %v1197, %v1191
          %v1200 = vadd.f32 %v1194, %v1198
          %v1201 = vadd.f32 %v1195, %v1199
          %vm1202 = vmand %vm310, %vm324
          %vm1203 = vmand %vm311, %vm325
          %v1204 = vsel %vm1202, %v1200, 0.0
          %v1205 = vsel %vm1203, %v1201, 0.0
          %v1206 = vadd.f32 %v1090, %v1204
          %v1207 = vadd.f32 %v1091, %v1205
          %1208 = vrot.lane.b32.xlu0 %v354, 114
          %v1209 = vpop.permute.xlu0 %1208
          %1210 = vrot.lane.b32.xlu0 %v358, 114
          %v1211 = vpop.permute.xlu0 %1210
          %vm1212 = vcmp.lt.s32.totalorder %v286, 114
          %v1213 = vsel %vm1212, %v1209, %v1211
          %v1214 = vsel %vm1212, %v1211, %v1209
          %1215 = vrot.lane.b32.xlu0 %v372, 114
          %v1216 = vpop.permute.xlu0 %1215
          %1217 = vrot.lane.b32.xlu0 %v376, 114
          %v1218 = vpop.permute.xlu0 %1217
          %v1219 = vsel %vm1212, %v1216, %v1218
          %v1220 = vsel %vm1212, %v1218, %v1216
          %s1221 = sld [smem:[#allocation8 + $0x1d]]
          %v1222 = vstv %s1221
          %v1223 = vmul.f32 %v1222, %v1213
          %v1224 = vmul.f32 %v1222, %v1214
          %s1225 = sld [smem:[#allocation8 + $0x4e]]
          %v1226 = vstv %s1225
          %v1227 = vmul.f32 %v1226, %v1219
          %v1228 = vmul.f32 %v1226, %v1220
          %v1229 = vadd.f32 %v1223, %v1227
          %v1230 = vadd.f32 %v1224, %v1228
          %vm1231 = vmand %vm310, %vm328
          %vm1232 = vmand %vm311, %vm329
          %v1233 = vsel %vm1231, %v1229, 0.0
          %v1234 = vsel %vm1232, %v1230, 0.0
          %v1235 = vadd.f32 %v1119, %v1233
          %v1236 = vadd.f32 %v1120, %v1234
          %1237 = vrot.lane.b32.xlu0 %v354, 113
          %v1238 = vpop.permute.xlu0 %1237
          %1239 = vrot.lane.b32.xlu0 %v358, 113
          %v1240 = vpop.permute.xlu0 %1239
          %vm1241 = vcmp.lt.s32.totalorder %v286, 113
          %v1242 = vsel %vm1241, %v1238, %v1240
          %v1243 = vsel %vm1241, %v1240, %v1238
          %1244 = vrot.lane.b32.xlu0 %v372, 113
          %v1245 = vpop.permute.xlu0 %1244
          %1246 = vrot.lane.b32.xlu0 %v376, 113
          %v1247 = vpop.permute.xlu0 %1246
          %v1248 = vsel %vm1241, %v1245, %v1247
          %v1249 = vsel %vm1241, %v1247, %v1245
          %s1250 = sld [smem:[#allocation8 + $0x1e]]
          %v1251 = vstv %s1250
          %v1252 = vmul.f32 %v1251, %v1242
          %v1253 = vmul.f32 %v1251, %v1243
          %s1254 = sld [smem:[#allocation8 + $0x4f]]
          %v1255 = vstv %s1254
          %v1256 = vmul.f32 %v1255, %v1248
          %v1257 = vmul.f32 %v1255, %v1249
          %v1258 = vadd.f32 %v1252, %v1256
          %v1259 = vadd.f32 %v1253, %v1257
          %vm1260 = vmand %vm310, %vm332
          %vm1261 = vmand %vm311, %vm333
          %v1262 = vsel %vm1260, %v1258, 0.0
          %v1263 = vsel %vm1261, %v1259, 0.0
          %v1264 = vadd.f32 %v1148, %v1262
          %v1265 = vadd.f32 %v1149, %v1263
          %1266 = vrot.lane.b32.xlu0 %v354, 112
          %v1267 = vpop.permute.xlu0 %1266
          %1268 = vrot.lane.b32.xlu0 %v358, 112
          %v1269 = vpop.permute.xlu0 %1268
          %vm1270 = vcmp.lt.s32.totalorder %v286, 112
          %v1271 = vsel %vm1270, %v1267, %v1269
          %v1272 = vsel %vm1270, %v1269, %v1267
          %1273 = vrot.lane.b32.xlu0 %v372, 112
          %v1274 = vpop.permute.xlu0 %1273
          %1275 = vrot.lane.b32.xlu0 %v376, 112
          %v1276 = vpop.permute.xlu0 %1275
          %v1277 = vsel %vm1270, %v1274, %v1276
          %v1278 = vsel %vm1270, %v1276, %v1274
          %s1279 = sld [smem:[#allocation8 + $0x1f]]
          %v1280 = vstv %s1279
          %v1281 = vmul.f32 %v1280, %v1271
          %v1282 = vmul.f32 %v1280, %v1272
          %s1283 = sld [smem:[#allocation8 + $0x50]]
          %v1284 = vstv %s1283
          %v1285 = vmul.f32 %v1284, %v1277
          %v1286 = vmul.f32 %v1284, %v1278
          %v1287 = vadd.f32 %v1281, %v1285
          %v1288 = vadd.f32 %v1282, %v1286
          %vm1289 = vmand %vm310, %vm336
          %vm1290 = vmand %vm311, %vm337
          %v1291 = vsel %vm1289, %v1287, 0.0
          %v1292 = vsel %vm1290, %v1288, 0.0
          %v1293 = vadd.f32 %v1177, %v1291
          %v1294 = vadd.f32 %v1178, %v1292
          %1295 = vrot.lane.b32.xlu0 %v354, 111
          %v1296 = vpop.permute.xlu0 %1295
          %1297 = vrot.lane.b32.xlu0 %v358, 111
          %v1298 = vpop.permute.xlu0 %1297
          %vm1299 = vcmp.lt.s32.totalorder %v286, 111
          %v1300 = vsel %vm1299, %v1296, %v1298
          %v1301 = vsel %vm1299, %v1298, %v1296
          %1302 = vrot.lane.b32.xlu0 %v372, 111
          %v1303 = vpop.permute.xlu0 %1302
          %1304 = vrot.lane.b32.xlu0 %v376, 111
          %v1305 = vpop.permute.xlu0 %1304
          %v1306 = vsel %vm1299, %v1303, %v1305
          %v1307 = vsel %vm1299, %v1305, %v1303
          %s1308 = sld [smem:[#allocation8 + $0x20]]
          %v1309 = vstv %s1308
          %v1310 = vmul.f32 %v1309, %v1300
          %v1311 = vmul.f32 %v1309, %v1301
          %s1312 = sld [smem:[#allocation8 + $0x51]]
          %v1313 = vstv %s1312
          %v1314 = vmul.f32 %v1313, %v1306
          %v1315 = vmul.f32 %v1313, %v1307
          %v1316 = vadd.f32 %v1310, %v1314
          %v1317 = vadd.f32 %v1311, %v1315
          %vm1318 = vmand %vm310, %vm340
          %vm1319 = vmand %vm311, %vm341
          %v1320 = vsel %vm1318, %v1316, 0.0
          %v1321 = vsel %vm1319, %v1317, 0.0
          %v1322 = vadd.f32 %v1206, %v1320
          %v1323 = vadd.f32 %v1207, %v1321
          %1324 = vrot.lane.b32.xlu0 %v354, 110
          %v1325 = vpop.permute.xlu0 %1324
          %1326 = vrot.lane.b32.xlu0 %v358, 110
          %v1327 = vpop.permute.xlu0 %1326
          %vm1328 = vcmp.lt.s32.totalorder %v286, 110
          %v1329 = vsel %vm1328, %v1325, %v1327
          %v1330 = vsel %vm1328, %v1327, %v1325
          %1331 = vrot.lane.b32.xlu0 %v372, 110
          %v1332 = vpop.permute.xlu0 %1331
          %1333 = vrot.lane.b32.xlu0 %v376, 110
          %v1334 = vpop.permute.xlu0 %1333
          %v1335 = vsel %vm1328, %v1332, %v1334
          %v1336 = vsel %vm1328, %v1334, %v1332
          %s1337 = sld [smem:[#allocation8 + $0x21]]
          %v1338 = vstv %s1337
          %v1339 = vmul.f32 %v1338, %v1329
          %v1340 = vmul.f32 %v1338, %v1330
          %s1341 = sld [smem:[#allocation8 + $0x52]]
          %v1342 = vstv %s1341
          %v1343 = vmul.f32 %v1342, %v1335
          %v1344 = vmul.f32 %v1342, %v1336
          %v1345 = vadd.f32 %v1339, %v1343
          %v1346 = vadd.f32 %v1340, %v1344
          %vm1347 = vmand %vm310, %vm344
          %vm1348 = vmand %vm311, %vm345
          %v1349 = vsel %vm1347, %v1345, 0.0
          %v1350 = vsel %vm1348, %v1346, 0.0
          %v1351 = vadd.f32 %v1235, %v1349
          %v1352 = vadd.f32 %v1236, %v1350
          %1353 = vrot.lane.b32.xlu0 %v354, 109
          %v1354 = vpop.permute.xlu0 %1353
          %1355 = vrot.lane.b32.xlu0 %v358, 109
          %v1356 = vpop.permute.xlu0 %1355
          %vm1357 = vcmp.lt.s32.totalorder %v286, 109
          %v1358 = vsel %vm1357, %v1354, %v1356
          %v1359 = vsel %vm1357, %v1356, %v1354
          %1360 = vrot.lane.b32.xlu0 %v372, 109
          %v1361 = vpop.permute.xlu0 %1360
          %1362 = vrot.lane.b32.xlu0 %v376, 109
          %v1363 = vpop.permute.xlu0 %1362
          %v1364 = vsel %vm1357, %v1361, %v1363
          %v1365 = vsel %vm1357, %v1363, %v1361
          %s1366 = sld [smem:[#allocation8 + $0x22]]
          %v1367 = vstv %s1366
          %v1368 = vmul.f32 %v1367, %v1358
          %v1369 = vmul.f32 %v1367, %v1359
          %s1370 = sld [smem:[#allocation8 + $0x53]]
          %v1371 = vstv %s1370
          %v1372 = vmul.f32 %v1371, %v1364
          %v1373 = vmul.f32 %v1371, %v1365
          %v1374 = vadd.f32 %v1368, %v1372
          %v1375 = vadd.f32 %v1369, %v1373
          %vm1376 = vmand %vm310, %vm348
          %vm1377 = vmand %vm311, %vm349
          %v1378 = vsel %vm1376, %v1374, 0.0
          %v1379 = vsel %vm1377, %v1375, 0.0
          %v1380 = vadd.f32 %v1264, %v1378
          %v1381 = vadd.f32 %v1265, %v1379
          %1382 = vrot.lane.b32.xlu0 %v354, 99
          %v1383 = vpop.permute.xlu0 %1382
          %1384 = vrot.lane.b32.xlu0 %v358, 99
          %v1385 = vpop.permute.xlu0 %1384
          %vm1386 = vcmp.lt.s32.totalorder %v286, 99
          %v1387 = vsel %vm1386, %v1383, %v1385
          %v1388 = vsel %vm1386, %v1385, %v1383
          %1389 = vrot.lane.b32.xlu0 %v372, 99
          %v1390 = vpop.permute.xlu0 %1389
          %1391 = vrot.lane.b32.xlu0 %v376, 99
          %v1392 = vpop.permute.xlu0 %1391
          %v1393 = vsel %vm1386, %v1390, %v1392
          %v1394 = vsel %vm1386, %v1392, %v1390
          %s1395 = sld [smem:[#allocation8 + $0x23]]
          %v1396 = vstv %s1395
          %v1397 = vmul.f32 %v1396, %v1387
          %v1398 = vmul.f32 %v1396, %v1388
          %s1399 = sld [smem:[#allocation8 + $0x54]]
          %v1400 = vstv %s1399
          %v1401 = vmul.f32 %v1400, %v1393
          %v1402 = vmul.f32 %v1400, %v1394
          %v1403 = vadd.f32 %v1397, %v1401
          %v1404 = vadd.f32 %v1398, %v1402
          %vm1405 = vmand %vm314, %vm324
          %vm1406 = vmand %vm315, %vm325
          %v1407 = vsel %vm1405, %v1403, 0.0
          %v1408 = vsel %vm1406, %v1404, 0.0
          %v1409 = vadd.f32 %v1293, %v1407
          %v1410 = vadd.f32 %v1294, %v1408
          %1411 = vrot.lane.b32.xlu0 %v354, 98
          %v1412 = vpop.permute.xlu0 %1411
          %1413 = vrot.lane.b32.xlu0 %v358, 98
          %v1414 = vpop.permute.xlu0 %1413
          %vm1415 = vcmp.lt.s32.totalorder %v286, 98
          %v1416 = vsel %vm1415, %v1412, %v1414
          %v1417 = vsel %vm1415, %v1414, %v1412
          %1418 = vrot.lane.b32.xlu0 %v372, 98
          %v1419 = vpop.permute.xlu0 %1418
          %1420 = vrot.lane.b32.xlu0 %v376, 98
          %v1421 = vpop.permute.xlu0 %1420
          %v1422 = vsel %vm1415, %v1419, %v1421
          %v1423 = vsel %vm1415, %v1421, %v1419
          %s1424 = sld [smem:[#allocation8 + $0x24]]
          %v1425 = vstv %s1424
          %v1426 = vmul.f32 %v1425, %v1416
          %v1427 = vmul.f32 %v1425, %v1417
          %s1428 = sld [smem:[#allocation8 + $0x55]]
          %v1429 = vstv %s1428
          %v1430 = vmul.f32 %v1429, %v1422
          %v1431 = vmul.f32 %v1429, %v1423
          %v1432 = vadd.f32 %v1426, %v1430
          %v1433 = vadd.f32 %v1427, %v1431
          %vm1434 = vmand %vm314, %vm328
          %vm1435 = vmand %vm315, %vm329
          %v1436 = vsel %vm1434, %v1432, 0.0
          %v1437 = vsel %vm1435, %v1433, 0.0
          %v1438 = vadd.f32 %v1322, %v1436
          %v1439 = vadd.f32 %v1323, %v1437
          %1440 = vrot.lane.b32.xlu0 %v354, 97
          %v1441 = vpop.permute.xlu0 %1440
          %1442 = vrot.lane.b32.xlu0 %v358, 97
          %v1443 = vpop.permute.xlu0 %1442
          %vm1444 = vcmp.lt.s32.totalorder %v286, 97
          %v1445 = vsel %vm1444, %v1441, %v1443
          %v1446 = vsel %vm1444, %v1443, %v1441
          %1447 = vrot.lane.b32.xlu0 %v372, 97
          %v1448 = vpop.permute.xlu0 %1447
          %1449 = vrot.lane.b32.xlu0 %v376, 97
          %v1450 = vpop.permute.xlu0 %1449
          %v1451 = vsel %vm1444, %v1448, %v1450
          %v1452 = vsel %vm1444, %v1450, %v1448
          %s1453 = sld [smem:[#allocation8 + $0x25]]
          %v1454 = vstv %s1453
          %v1455 = vmul.f32 %v1454, %v1445
          %v1456 = vmul.f32 %v1454, %v1446
          %s1457 = sld [smem:[#allocation8 + $0x56]]
          %v1458 = vstv %s1457
          %v1459 = vmul.f32 %v1458, %v1451
          %v1460 = vmul.f32 %v1458, %v1452
          %v1461 = vadd.f32 %v1455, %v1459
          %v1462 = vadd.f32 %v1456, %v1460
          %vm1463 = vmand %vm314, %vm332
          %vm1464 = vmand %vm315, %vm333
          %v1465 = vsel %vm1463, %v1461, 0.0
          %v1466 = vsel %vm1464, %v1462, 0.0
          %v1467 = vadd.f32 %v1351, %v1465
          %v1468 = vadd.f32 %v1352, %v1466
          %1469 = vrot.lane.b32.xlu0 %v354, 96
          %v1470 = vpop.permute.xlu0 %1469
          %1471 = vrot.lane.b32.xlu0 %v358, 96
          %v1472 = vpop.permute.xlu0 %1471
          %vm1473 = vcmp.lt.s32.totalorder %v286, 96
          %v1474 = vsel %vm1473, %v1470, %v1472
          %v1475 = vsel %vm1473, %v1472, %v1470
          %1476 = vrot.lane.b32.xlu0 %v372, 96
          %v1477 = vpop.permute.xlu0 %1476
          %1478 = vrot.lane.b32.xlu0 %v376, 96
          %v1479 = vpop.permute.xlu0 %1478
          %v1480 = vsel %vm1473, %v1477, %v1479
          %v1481 = vsel %vm1473, %v1479, %v1477
          %s1482 = sld [smem:[#allocation8 + $0x26]]
          %v1483 = vstv %s1482
          %v1484 = vmul.f32 %v1483, %v1474
          %v1485 = vmul.f32 %v1483, %v1475
          %s1486 = sld [smem:[#allocation8 + $0x57]]
          %v1487 = vstv %s1486
          %v1488 = vmul.f32 %v1487, %v1480
          %v1489 = vmul.f32 %v1487, %v1481
          %v1490 = vadd.f32 %v1484, %v1488
          %v1491 = vadd.f32 %v1485, %v1489
          %vm1492 = vmand %vm314, %vm336
          %vm1493 = vmand %vm315, %vm337
          %v1494 = vsel %vm1492, %v1490, 0.0
          %v1495 = vsel %vm1493, %v1491, 0.0
          %v1496 = vadd.f32 %v1380, %v1494
          %v1497 = vadd.f32 %v1381, %v1495
          %1498 = vrot.lane.b32.xlu0 %v354, 95
          %v1499 = vpop.permute.xlu0 %1498
          %1500 = vrot.lane.b32.xlu0 %v358, 95
          %v1501 = vpop.permute.xlu0 %1500
          %vm1502 = vcmp.lt.s32.totalorder %v286, 95
          %v1503 = vsel %vm1502, %v1499, %v1501
          %v1504 = vsel %vm1502, %v1501, %v1499
          %1505 = vrot.lane.b32.xlu0 %v372, 95
          %v1506 = vpop.permute.xlu0 %1505
          %1507 = vrot.lane.b32.xlu0 %v376, 95
          %v1508 = vpop.permute.xlu0 %1507
          %v1509 = vsel %vm1502, %v1506, %v1508
          %v1510 = vsel %vm1502, %v1508, %v1506
          %s1511 = sld [smem:[#allocation8 + $0x27]]
          %v1512 = vstv %s1511
          %v1513 = vmul.f32 %v1512, %v1503
          %v1514 = vmul.f32 %v1512, %v1504
          %s1515 = sld [smem:[#allocation8 + $0x58]]
          %v1516 = vstv %s1515
          %v1517 = vmul.f32 %v1516, %v1509
          %v1518 = vmul.f32 %v1516, %v1510
          %v1519 = vadd.f32 %v1513, %v1517
          %v1520 = vadd.f32 %v1514, %v1518
          %vm1521 = vmand %vm314, %vm340
          %vm1522 = vmand %vm315, %vm341
          %v1523 = vsel %vm1521, %v1519, 0.0
          %v1524 = vsel %vm1522, %v1520, 0.0
          %v1525 = vadd.f32 %v1409, %v1523
          %v1526 = vadd.f32 %v1410, %v1524
          %1527 = vrot.lane.b32.xlu0 %v354, 94
          %v1528 = vpop.permute.xlu0 %1527
          %1529 = vrot.lane.b32.xlu0 %v358, 94
          %v1530 = vpop.permute.xlu0 %1529
          %vm1531 = vcmp.lt.s32.totalorder %v286, 94
          %v1532 = vsel %vm1531, %v1528, %v1530
          %v1533 = vsel %vm1531, %v1530, %v1528
          %1534 = vrot.lane.b32.xlu0 %v372, 94
          %v1535 = vpop.permute.xlu0 %1534
          %1536 = vrot.lane.b32.xlu0 %v376, 94
          %v1537 = vpop.permute.xlu0 %1536
          %v1538 = vsel %vm1531, %v1535, %v1537
          %v1539 = vsel %vm1531, %v1537, %v1535
          %s1540 = sld [smem:[#allocation8 + $0x28]]
          %v1541 = vstv %s1540
          %v1542 = vmul.f32 %v1541, %v1532
          %v1543 = vmul.f32 %v1541, %v1533
          %s1544 = sld [smem:[#allocation8 + $0x59]]
          %v1545 = vstv %s1544
          %v1546 = vmul.f32 %v1545, %v1538
          %v1547 = vmul.f32 %v1545, %v1539
          %v1548 = vadd.f32 %v1542, %v1546
          %v1549 = vadd.f32 %v1543, %v1547
          %vm1550 = vmand %vm314, %vm344
          %vm1551 = vmand %vm315, %vm345
          %v1552 = vsel %vm1550, %v1548, 0.0
          %v1553 = vsel %vm1551, %v1549, 0.0
          %v1554 = vadd.f32 %v1438, %v1552
          %v1555 = vadd.f32 %v1439, %v1553
          %1556 = vrot.lane.b32.xlu0 %v354, 93
          %v1557 = vpop.permute.xlu0 %1556
          %1558 = vrot.lane.b32.xlu0 %v358, 93
          %v1559 = vpop.permute.xlu0 %1558
          %vm1560 = vcmp.lt.s32.totalorder %v286, 93
          %v1561 = vsel %vm1560, %v1557, %v1559
          %v1562 = vsel %vm1560, %v1559, %v1557
          %1563 = vrot.lane.b32.xlu0 %v372, 93
          %v1564 = vpop.permute.xlu0 %1563
          %1565 = vrot.lane.b32.xlu0 %v376, 93
          %v1566 = vpop.permute.xlu0 %1565
          %v1567 = vsel %vm1560, %v1564, %v1566
          %v1568 = vsel %vm1560, %v1566, %v1564
          %s1569 = sld [smem:[#allocation8 + $0x29]]
          %v1570 = vstv %s1569
          %v1571 = vmul.f32 %v1570, %v1561
          %v1572 = vmul.f32 %v1570, %v1562
          %s1573 = sld [smem:[#allocation8 + $0x5a]]
          %v1574 = vstv %s1573
          %v1575 = vmul.f32 %v1574, %v1567
          %v1576 = vmul.f32 %v1574, %v1568
          %v1577 = vadd.f32 %v1571, %v1575
          %v1578 = vadd.f32 %v1572, %v1576
          %vm1579 = vmand %vm314, %vm348
          %vm1580 = vmand %vm315, %vm349
          %v1581 = vsel %vm1579, %v1577, 0.0
          %v1582 = vsel %vm1580, %v1578, 0.0
          %v1583 = vadd.f32 %v1467, %v1581
          %v1584 = vadd.f32 %v1468, %v1582
          %1585 = vrot.lane.b32.xlu0 %v354, 83
          %v1586 = vpop.permute.xlu0 %1585
          %1587 = vrot.lane.b32.xlu0 %v358, 83
          %v1588 = vpop.permute.xlu0 %1587
          %vm1589 = vcmp.lt.s32.totalorder %v286, 83
          %v1590 = vsel %vm1589, %v1586, %v1588
          %v1591 = vsel %vm1589, %v1588, %v1586
          %1592 = vrot.lane.b32.xlu0 %v372, 83
          %v1593 = vpop.permute.xlu0 %1592
          %1594 = vrot.lane.b32.xlu0 %v376, 83
          %v1595 = vpop.permute.xlu0 %1594
          %v1596 = vsel %vm1589, %v1593, %v1595
          %v1597 = vsel %vm1589, %v1595, %v1593
          %s1598 = sld [smem:[#allocation8 + $0x2a]]
          %v1599 = vstv %s1598
          %v1600 = vmul.f32 %v1599, %v1590
          %v1601 = vmul.f32 %v1599, %v1591
          %s1602 = sld [smem:[#allocation8 + $0x5b]]
          %v1603 = vstv %s1602
          %v1604 = vmul.f32 %v1603, %v1596
          %v1605 = vmul.f32 %v1603, %v1597
          %v1606 = vadd.f32 %v1600, %v1604
          %v1607 = vadd.f32 %v1601, %v1605
          %vm1608 = vmand %vm318, %vm324
          %vm1609 = vmand %vm319, %vm325
          %v1610 = vsel %vm1608, %v1606, 0.0
          %v1611 = vsel %vm1609, %v1607, 0.0
          %v1612 = vadd.f32 %v1496, %v1610
          %v1613 = vadd.f32 %v1497, %v1611
          %1614 = vrot.lane.b32.xlu0 %v354, 82
          %v1615 = vpop.permute.xlu0 %1614
          %1616 = vrot.lane.b32.xlu0 %v358, 82
          %v1617 = vpop.permute.xlu0 %1616
          %vm1618 = vcmp.lt.s32.totalorder %v286, 82
          %v1619 = vsel %vm1618, %v1615, %v1617
          %v1620 = vsel %vm1618, %v1617, %v1615
          %1621 = vrot.lane.b32.xlu0 %v372, 82
          %v1622 = vpop.permute.xlu0 %1621
          %1623 = vrot.lane.b32.xlu0 %v376, 82
          %v1624 = vpop.permute.xlu0 %1623
          %v1625 = vsel %vm1618, %v1622, %v1624
          %v1626 = vsel %vm1618, %v1624, %v1622
          %s1627 = sld [smem:[#allocation8 + $0x2b]]
          %v1628 = vstv %s1627
          %v1629 = vmul.f32 %v1628, %v1619
          %v1630 = vmul.f32 %v1628, %v1620
          %s1631 = sld [smem:[#allocation8 + $0x5c]]
          %v1632 = vstv %s1631
          %v1633 = vmul.f32 %v1632, %v1625
          %v1634 = vmul.f32 %v1632, %v1626
          %v1635 = vadd.f32 %v1629, %v1633
          %v1636 = vadd.f32 %v1630, %v1634
          %vm1637 = vmand %vm318, %vm328
          %vm1638 = vmand %vm319, %vm329
          %v1639 = vsel %vm1637, %v1635, 0.0
          %v1640 = vsel %vm1638, %v1636, 0.0
          %v1641 = vadd.f32 %v1525, %v1639
          %v1642 = vadd.f32 %v1526, %v1640
          %1643 = vrot.lane.b32.xlu0 %v354, 81
          %v1644 = vpop.permute.xlu0 %1643
          %1645 = vrot.lane.b32.xlu0 %v358, 81
          %v1646 = vpop.permute.xlu0 %1645
          %vm1647 = vcmp.lt.s32.totalorder %v286, 81
          %v1648 = vsel %vm1647, %v1644, %v1646
          %v1649 = vsel %vm1647, %v1646, %v1644
          %1650 = vrot.lane.b32.xlu0 %v372, 81
          %v1651 = vpop.permute.xlu0 %1650
          %1652 = vrot.lane.b32.xlu0 %v376, 81
          %v1653 = vpop.permute.xlu0 %1652
          %v1654 = vsel %vm1647, %v1651, %v1653
          %v1655 = vsel %vm1647, %v1653, %v1651
          %s1656 = sld [smem:[#allocation8 + $0x2c]]
          %v1657 = vstv %s1656
          %v1658 = vmul.f32 %v1657, %v1648
          %v1659 = vmul.f32 %v1657, %v1649
          %s1660 = sld [smem:[#allocation8 + $0x5d]]
          %v1661 = vstv %s1660
          %v1662 = vmul.f32 %v1661, %v1654
          %v1663 = vmul.f32 %v1661, %v1655
          %v1664 = vadd.f32 %v1658, %v1662
          %v1665 = vadd.f32 %v1659, %v1663
          %vm1666 = vmand %vm318, %vm332
          %vm1667 = vmand %vm319, %vm333
          %v1668 = vsel %vm1666, %v1664, 0.0
          %v1669 = vsel %vm1667, %v1665, 0.0
          %v1670 = vadd.f32 %v1554, %v1668
          %v1671 = vadd.f32 %v1555, %v1669
          %1672 = vrot.lane.b32.xlu0 %v354, 80
          %v1673 = vpop.permute.xlu0 %1672
          %1674 = vrot.lane.b32.xlu0 %v358, 80
          %v1675 = vpop.permute.xlu0 %1674
          %vm1676 = vcmp.lt.s32.totalorder %v286, 80
          %v1677 = vsel %vm1676, %v1673, %v1675
          %v1678 = vsel %vm1676, %v1675, %v1673
          %1679 = vrot.lane.b32.xlu0 %v372, 80
          %v1680 = vpop.permute.xlu0 %1679
          %1681 = vrot.lane.b32.xlu0 %v376, 80
          %v1682 = vpop.permute.xlu0 %1681
          %v1683 = vsel %vm1676, %v1680, %v1682
          %v1684 = vsel %vm1676, %v1682, %v1680
          %s1685 = sld [smem:[#allocation8 + $0x2d]]
          %v1686 = vstv %s1685
          %v1687 = vmul.f32 %v1686, %v1677
          %v1688 = vmul.f32 %v1686, %v1678
          %s1689 = sld [smem:[#allocation8 + $0x5e]]
          %v1690 = vstv %s1689
          %v1691 = vmul.f32 %v1690, %v1683
          %v1692 = vmul.f32 %v1690, %v1684
          %v1693 = vadd.f32 %v1687, %v1691
          %v1694 = vadd.f32 %v1688, %v1692
          %vm1695 = vmand %vm318, %vm336
          %vm1696 = vmand %vm319, %vm337
          %v1697 = vsel %vm1695, %v1693, 0.0
          %v1698 = vsel %vm1696, %v1694, 0.0
          %v1699 = vadd.f32 %v1583, %v1697
          %v1700 = vadd.f32 %v1584, %v1698
          %1701 = vrot.lane.b32.xlu0 %v354, 79
          %v1702 = vpop.permute.xlu0 %1701
          %1703 = vrot.lane.b32.xlu0 %v358, 79
          %v1704 = vpop.permute.xlu0 %1703
          %vm1705 = vcmp.lt.s32.totalorder %v286, 79
          %v1706 = vsel %vm1705, %v1702, %v1704
          %v1707 = vsel %vm1705, %v1704, %v1702
          %1708 = vrot.lane.b32.xlu0 %v372, 79
          %v1709 = vpop.permute.xlu0 %1708
          %1710 = vrot.lane.b32.xlu0 %v376, 79
          %v1711 = vpop.permute.xlu0 %1710
          %v1712 = vsel %vm1705, %v1709, %v1711
          %v1713 = vsel %vm1705, %v1711, %v1709
          %s1714 = sld [smem:[#allocation8 + $0x2e]]
          %v1715 = vstv %s1714
          %v1716 = vmul.f32 %v1715, %v1706
          %v1717 = vmul.f32 %v1715, %v1707
          %s1718 = sld [smem:[#allocation8 + $0x5f]]
          %v1719 = vstv %s1718
          %v1720 = vmul.f32 %v1719, %v1712
          %v1721 = vmul.f32 %v1719, %v1713
          %v1722 = vadd.f32 %v1716, %v1720
          %v1723 = vadd.f32 %v1717, %v1721
          %vm1724 = vmand %vm318, %vm340
          %vm1725 = vmand %vm319, %vm341
          %v1726 = vsel %vm1724, %v1722, 0.0
          %v1727 = vsel %vm1725, %v1723, 0.0
          %v1728 = vadd.f32 %v1612, %v1726
          %v1729 = vadd.f32 %v1613, %v1727
          %1730 = vrot.lane.b32.xlu0 %v354, 78
          %v1731 = vpop.permute.xlu0 %1730
          %1732 = vrot.lane.b32.xlu0 %v358, 78
          %v1733 = vpop.permute.xlu0 %1732
          %vm1734 = vcmp.lt.s32.totalorder %v286, 78
          %v1735 = vsel %vm1734, %v1731, %v1733
          %v1736 = vsel %vm1734, %v1733, %v1731
          %1737 = vrot.lane.b32.xlu0 %v372, 78
          %v1738 = vpop.permute.xlu0 %1737
          %1739 = vrot.lane.b32.xlu0 %v376, 78
          %v1740 = vpop.permute.xlu0 %1739
          %v1741 = vsel %vm1734, %v1738, %v1740
          %v1742 = vsel %vm1734, %v1740, %v1738
          %s1743 = sld [smem:[#allocation8 + $0x2f]]
          %v1744 = vstv %s1743
          %v1745 = vmul.f32 %v1744, %v1735
          %v1746 = vmul.f32 %v1744, %v1736
          %s1747 = sld [smem:[#allocation8 + $0x60]]
          %v1748 = vstv %s1747
          %v1749 = vmul.f32 %v1748, %v1741
          %v1750 = vmul.f32 %v1748, %v1742
          %v1751 = vadd.f32 %v1745, %v1749
          %v1752 = vadd.f32 %v1746, %v1750
          %vm1753 = vmand %vm318, %vm344
          %vm1754 = vmand %vm319, %vm345
          %v1755 = vsel %vm1753, %v1751, 0.0
          %v1756 = vsel %vm1754, %v1752, 0.0
          %v1757 = vadd.f32 %v1641, %v1755
          %v1758 = vadd.f32 %v1642, %v1756
          %1759 = vrot.lane.b32.xlu0 %v354, 77
          %v1760 = vpop.permute.xlu0 %1759
          %1761 = vrot.lane.b32.xlu0 %v358, 77
          %v1762 = vpop.permute.xlu0 %1761
          %vm1763 = vcmp.lt.s32.totalorder %v286, 77
          %v1764 = vsel %vm1763, %v1760, %v1762
          %v1765 = vsel %vm1763, %v1762, %v1760
          %1766 = vrot.lane.b32.xlu0 %v372, 77
          %v1767 = vpop.permute.xlu0 %1766
          %1768 = vrot.lane.b32.xlu0 %v376, 77
          %v1769 = vpop.permute.xlu0 %1768
          %v1770 = vsel %vm1763, %v1767, %v1769
          %v1771 = vsel %vm1763, %v1769, %v1767
          %s1772 = sld [smem:[#allocation8 + $0x30]]
          %v1773 = vstv %s1772
          %v1774 = vmul.f32 %v1773, %v1764
          %v1775 = vmul.f32 %v1773, %v1765
          %s1776 = sld [smem:[#allocation8 + $0x61]]
          %v1777 = vstv %s1776
          %v1778 = vmul.f32 %v1777, %v1770
          %v1779 = vmul.f32 %v1777, %v1771
          %v1780 = vadd.f32 %v1774, %v1778
          %v1781 = vadd.f32 %v1775, %v1779
          %vm1782 = vmand %vm318, %vm348
          %vm1783 = vmand %vm319, %vm349
          %v1784 = vsel %vm1782, %v1780, 0.0
          %v1785 = vsel %vm1783, %v1781, 0.0
          %v1786 = vadd.f32 %v1670, %v1784
          %v1787 = vadd.f32 %v1671, %v1785
          %v1788 = vadd.f32 %v1786, %v1699
          %v1789 = vadd.f32 %v1787, %v1700
          %v1790 = vadd.f32 %v1728, %v1757
          %v1791 = vadd.f32 %v1729, %v1758
          %v1792 = vadd.f32 %v1788, %v1790
          %v1793 = vadd.f32 %v1789, %v1791
          %v1794 = vxor.u32 %v1792, 2147483648
          %v1795 = vxor.u32 %v1793, 2147483648
          %v1796 = vmul.f32 %v1794, 1.442695
          %v1797 = vpow.pop %v1796
          %v1798 = vmul.f32 %v1795, 1.442695
          %v1799 = vpow.pop %v1798
          %v1800 = vadd.f32 %v1797, 1.0
          %v1801 = vadd.f32 %v1799, 1.0
          %v1802 = vrcp.pop %v1800
          %v1803 = vmul.f32 1.0, %v1802
          %v1804 = vrcp.pop %v1801
          %v1805 = vmul.f32 1.0, %v1804
          %v1808 = vcombine.low %v1803, %v1805
          %v1810 = vunpack.c.l.s4 1966171168
          %v1811 = vunpack.c.0.s8 %v1810
          %v1812 = vlaneseq
          %v1813 = vshrl.u32 %v1812, 7
          %v1814 = vsub.s32 %v1811, %v1813
          %v1815 = vrot.slane %v1808, %v1814
          %v1817 = vunpack.c.l.s4 1966171168
          %v1818 = vunpack.c.0.s8 %v1817
          %v1819 = vlaneseq
          %v1820 = vshrl.u32 %v1819, 7
          %v1821 = vsub.s32 %v1818, %v1820
          %v1822 = vrot.slane %v1815, %v1821
          %1824 = vst.msk [vmem:[%s189] sm:$0x3] %vm242, %v1822
        $region44: #{tpu_custom_call.1} parent=27 // pred_fallthru
          _
        %s1825 = sand.u32 %s89, 1
        %s1826 = scalar_lea.sflag [#allocation6], %s1825
        %s1827 = sand.u32 %s89, 1
        %s1828 = smul.addr %s1827, 2
        %s1829 = scalar_lea.vmem [#allocation9], %s1828
        // Predicated region
        $region45: #{tpu_custom_call.1} parent=27 // pred_check
          %p1830 = pneg %p99
        $region46: #{tpu_custom_call.1} parent=27 // pred_check_branch
          %1832 = sbr.rel (%p1830) target = $region48
        $region47: #{tpu_custom_call.1} parent=27 // pred_region
          %s1834 = ssub.s32 32, 32
          %1835 = vsyncadd %s1826, %s1834
          %s1836 = smul.addr %s24, 2
          %s1837 = smul.addr %s1836, 16
          %s1838 = scalar_lea.hbm %s2, %s1837
          %s1840 = sshll.u32 %s1829, 4
          %s1841 = int_to_ptr.vmem [resolvable:$true] %s1840
          %1843 = dma.vmem_to_hbm [thread:$0]  %s1841, 32, %s1838, %s1826
        $region48: #{tpu_custom_call.1} parent=27 // pred_fallthru
          _
      $region28: #{tpu_custom_call.1} parent=5 // pred_fallthru
        _
      %p1844 = scmp.le.s32.totalorder 2, %s15
      // Predicated region
      $region49: #{tpu_custom_call.1} parent=5 // pred_check
        %p1845 = pneg %p1844
      $region50: #{tpu_custom_call.1} parent=5 // pred_check_branch
        %1847 = sbr.rel (%p1845) target = $region52
      $region51: #{tpu_custom_call.1} parent=5 // pred_region
        %s1848 = ssub.s32 %s15, 2
        // Predicated region
        $region53: #{tpu_custom_call.1} parent=51 // pred_check
          %p1849 = pneg %p105
        $region54: #{tpu_custom_call.1} parent=51 // pred_check_branch
          %1851 = sbr.rel (%p1849) target = $region56
        $region55: #{tpu_custom_call.1} parent=51 // pred_region
          %s1852 = sand.u32 %s90, 1
          %s1853 = scalar_lea.sflag [#allocation6], %s1852
          %s1854 = sand.u32 %s90, 1
          %s1855 = smul.addr %s1854, 2
          %s1856 = scalar_lea.vmem [#allocation9], %s1855
          %1857 = dma.done %s1853, 32
        $region56: #{tpu_custom_call.1} parent=51 // pred_fallthru
          _
      $region52: #{tpu_custom_call.1} parent=5 // pred_fallthru
        _
    $region6: #{tpu_custom_call.1} parent=1 // loop_footer
      %s19 = sadd.s32 1, %s15
    $region7: #{tpu_custom_call.1} parent=1 // loop_footer_branch
      %14 = sbr.rel target = $region3
    $region8: #{tpu_custom_call.1} parent=1 // loop_exit
      _
    %1858 = vsyncpa [#allocation5], 1
    %s1859 = scalar_lea.sflag [#allocation5], 1
    %1860 = vsyncpa %s1859, 1
    %1861 = vsyncpa [#allocation6], 1
    %s1862 = scalar_lea.sflag [#allocation6], 1
    %1863 = vsyncpa %s1862, 1
    %1864 = vsyncpa [#allocation7], 1
    %s1865 = scalar_lea.sflag [#allocation7], 1
    %1866 = vsyncpa %s1865, 1

</llo_original>
